<compile_context>
chip_gen: v6e
topology: v6e:2x2x1
jax: 0.10.0
libtpu: 0.0.40
codegen_flags: <defaults>
</compile_context>

<pallas_src>
import functools
import math

import numpy as np
import jax
import jax.numpy as jnp
from jax.experimental import pallas as pl
from jax.experimental.pallas import tpu as pltpu


# ----------------------------------------------------------------------------
# Pallas fused GEMM kernel:  O = maybe_relu(A @ B + bias [+ residual])
#   A, B in bf16; accumulator / epilogue in f32.
# ----------------------------------------------------------------------------
def _round_up(x, m):
    return ((x + m - 1) // m) * m


def _pick_tk(K, max_tk=1024):
    """Pick a K tile (multiple of 128) that minimizes zero padding of K."""
    Kr = _round_up(K, 128)
    if Kr <= max_tk:
        return Kr, Kr
    for tk in (1024, 896, 768, 640, 512, 384, 256, 128):
        if tk <= max_tk and Kr % tk == 0:
            return tk, Kr
    return max_tk, _round_up(K, max_tk)   # unreachable (Kr % 128 == 0)


@functools.lru_cache(maxsize=None)
def _build_gemm(Mpad, Kpad, Npad, tm, tk, tn, relu, has_residual):
    grid = (Mpad // tm, Npad // tn, Kpad // tk)

    if has_residual:
        def kernel(a_ref, b_ref, c_ref, r_ref, o_ref, acc_ref):
            k = pl.program_id(2)

            @pl.when(k == 0)
            def _():
                acc_ref[...] = jnp.zeros_like(acc_ref)

            acc_ref[...] += jnp.dot(a_ref[...], b_ref[...],
                                    preferred_element_type=jnp.float32)

            @pl.when(k == pl.num_programs(2) - 1)
            def _():
                y = acc_ref[...] + c_ref[...] + r_ref[...]
                if relu:
                    y = jnp.maximum(y, 0.0)
                o_ref[...] = y.astype(o_ref.dtype)

        in_specs = [
            pl.BlockSpec((tm, tk), lambda i, j, k: (i, k)),   # A  (bf16)
            pl.BlockSpec((tk, tn), lambda i, j, k: (k, j)),   # B  (bf16, scale folded)
            pl.BlockSpec((1, tn), lambda i, j, k: (0, j)),    # bias (f32)
            pl.BlockSpec((tm, tn), lambda i, j, k: (i, j)),   # residual (f32)
        ]
    else:
        def kernel(a_ref, b_ref, c_ref, o_ref, acc_ref):
            k = pl.program_id(2)

            @pl.when(k == 0)
            def _():
                acc_ref[...] = jnp.zeros_like(acc_ref)

            acc_ref[...] += jnp.dot(a_ref[...], b_ref[...],
                                    preferred_element_type=jnp.float32)

            @pl.when(k == pl.num_programs(2) - 1)
            def _():
                y = acc_ref[...] + c_ref[...]
                if relu:
                    y = jnp.maximum(y, 0.0)
                o_ref[...] = y.astype(o_ref.dtype)

        in_specs = [
            pl.BlockSpec((tm, tk), lambda i, j, k: (i, k)),   # A  (bf16)
            pl.BlockSpec((tk, tn), lambda i, j, k: (k, j)),   # B  (bf16)
            pl.BlockSpec((1, tn), lambda i, j, k: (0, j)),    # bias (f32)
        ]

    flops = 2 * Mpad * Kpad * Npad
    bytes_accessed = (Mpad * Kpad * 2 + Kpad * Npad * 2 + Mpad * Npad * 4
                      + (Mpad * Npad * 4 if has_residual else 0) + Npad * 4)

    call = pl.pallas_call(
        kernel,
        out_shape=jax.ShapeDtypeStruct((Mpad, Npad), jnp.float32),
        grid_spec=pltpu.PrefetchScalarGridSpec(
            num_scalar_prefetch=0,
            grid=grid,
            in_specs=in_specs,
            out_specs=pl.BlockSpec((tm, tn), lambda i, j, k: (i, j)),
            scratch_shapes=[pltpu.VMEM((tm, tn), jnp.float32)],
        ),
        compiler_params=pltpu.CompilerParams(
            dimension_semantics=("parallel", "parallel", "arbitrary")),
        cost_estimate=pl.CostEstimate(flops=flops, transcendentals=0,
                                      bytes_accessed=bytes_accessed),
    )
    return jax.jit(call)


def pallas_gemm_bias(a, b, bias, residual=None, relu=False):
    """a:(M,K) b:(K,N) bias:(N,) residual:(M,N)|None -> (M,N) f32."""
    M, K = a.shape
    K2, N = b.shape
    assert K == K2

    tm = min(512, _round_up(M, 16))           # 16: bf16 sublane packing
    tn = 256 if N >= 256 else 128
    tk, Kpad = _pick_tk(K)
    Mpad = _round_up(M, tm)
    Npad = _round_up(N, tn)

    a_p = jnp.zeros((Mpad, Kpad), jnp.bfloat16).at[:M, :K].set(
        a.astype(jnp.bfloat16))
    b_p = jnp.zeros((Kpad, Npad), jnp.bfloat16).at[:K, :N].set(
        b.astype(jnp.bfloat16))
    c_p = jnp.zeros((1, Npad), jnp.float32).at[0, :N].set(
        bias.astype(jnp.float32))

    has_res = residual is not None
    args = [a_p, b_p, c_p]
    if has_res:
        r_p = jnp.zeros((Mpad, Npad), jnp.float32).at[:M, :N].set(
            residual.astype(jnp.float32))
        args.append(r_p)

    fn = _build_gemm(Mpad, Kpad, Npad, tm, tk, tn, bool(relu), has_res)
    out = fn(*args)
    return out[:M, :N]


# ----------------------------------------------------------------------------
# Conv2d (NHWC activations, PyTorch OIHW weights) = im2col + fused Pallas GEMM
# ----------------------------------------------------------------------------
def conv2d(x, w, *, stride=1, padding=0, scale=None, bias=None,
           residual=None, relu=False):
    """x:(B,H,W,Cin) NHWC, w:(Cout,Cin,kh,kw). Returns NHWC (B,Ho,Wo,Cout)."""
    B, H, W, Cin = x.shape
    Cout, _, kh, kw = w.shape

    xh = x
    if padding:
        xh = jnp.pad(xh, ((0, 0), (padding, padding), (padding, padding), (0, 0)))
    Hp, Wp = H + 2 * padding, W + 2 * padding
    Ho = (Hp - kh) // stride + 1
    Wo = (Wp - kw) // stride + 1

    if kh == 1 and kw == 1:
        A = xh[:, ::stride, ::stride, :].reshape(B * Ho * Wo, Cin)
    else:
        cols = []
        for i in range(kh):
            for j in range(kw):
                cols.append(xh[:, i:i + stride * (Ho - 1) + 1:stride,
                               j:j + stride * (Wo - 1) + 1:stride, :])
        patches = cols[0] if len(cols) == 1 else jnp.concatenate(cols, axis=-1)
        A = patches.reshape(B * Ho * Wo, kh * kw * Cin)

    Wm = jnp.transpose(w, (2, 3, 1, 0)).reshape(kh * kw * Cin, Cout)
    if scale is not None:                       # fold BN scale into the weights
        Wm = Wm * scale[None, :].astype(Wm.dtype)
    if bias is None:
        bias = jnp.zeros((Cout,), jnp.float32)

    res2d = None
    if residual is not None:
        res2d = residual.reshape(B * Ho * Wo, Cout)

    y = pallas_gemm_bias(A, Wm, bias, res2d, relu)
    return y.reshape(B, Ho, Wo, Cout)


# ----------------------------------------------------------------------------
# JAX glue ops (max-pool, bilinear interpolate, adaptive avg-pool) — NHWC
# ----------------------------------------------------------------------------
def maxpool3x3_s2(x):
    B, H, W, C = x.shape
    xp = jnp.pad(x, ((0, 0), (1, 1), (1, 1), (0, 0)), constant_values=-jnp.inf)
    Ho = (H + 2 - 3) // 2 + 1
    Wo = (W + 2 - 3) // 2 + 1
    out = None
    for i in range(3):
        for j in range(3):
            sl = xp[:, i:i + 2 * (Ho - 1) + 1:2, j:j + 2 * (Wo - 1) + 1:2, :]
            out = sl if out is None else jnp.maximum(out, sl)
    return out


def _interp_matrix(in_size, out_size):
    # bilinear, align_corners=True
    if in_size == 1:
        return jnp.ones((out_size, 1), jnp.float32)
    if out_size == 1:
        m = np.zeros((1, in_size), np.float32)
        m[0, 0] = 1.0
        return jnp.asarray(m)
    src = np.linspace(0.0, in_size - 1.0, out_size)
    i0 = np.clip(np.floor(src).astype(np.int64), 0, in_size - 1)
    i1 = np.minimum(i0 + 1, in_size - 1)
    w1 = (src - i0).astype(np.float32)
    w0 = 1.0 - w1
    m = np.zeros((out_size, in_size), np.float32)
    m[np.arange(out_size), i0] += w0
    m[np.arange(out_size), i1] += w1
    return jnp.asarray(m)


def bilinear_resize(x, Ho, Wo):
    B, H, W, C = x.shape
    Rh = _interp_matrix(H, Ho)
    Rw = _interp_matrix(W, Wo)
    y = jnp.einsum('oh,bhwc->bowc', Rh, x)
    y = jnp.einsum('pw,bowc->bopc', Rw, y)
    return y


def _adaptive_pool_matrix(in_size, out_size):
    m = np.zeros((out_size, in_size), np.float32)
    for i in range(out_size):
        s = (i * in_size) // out_size
        e = -((-(i + 1) * in_size) // out_size)
        m[i, s:e] = 1.0 / (e - s)
    return jnp.asarray(m)


def adaptive_avg_pool(x, out_size=4):
    B, H, W, C = x.shape
    Ph = _adaptive_pool_matrix(H, out_size)
    Pw = _adaptive_pool_matrix(W, out_size)
    y = jnp.einsum('oh,bhwc->bowc', Ph, x)
    y = jnp.einsum('pw,bowc->bopc', Pw, y)
    return y


# ----------------------------------------------------------------------------
# Parameters (deterministic synthetic init)
# ----------------------------------------------------------------------------
class ParamGen:
    def __init__(self, key):
        self._key = key

    def _next(self):
        self._key, k = jax.random.split(self._key)
        return k

    def conv(self, cout, cin, kh, kw):
        fan_in = cin * kh * kw
        fan_out = cout * kh * kw
        limit = math.sqrt(6.0 / (fan_in + fan_out))   # xavier_uniform
        return jax.random.uniform(self._next(), (cout, cin, kh, kw),
                                  jnp.float32, -limit, limit)

    def bias(self, cout, fan_in):
        limit = 1.0 / math.sqrt(fan_in)
        return jax.random.uniform(self._next(), (cout,), jnp.float32, -limit, limit)


_RESNET50_CFG = [(64, 3, 1), (128, 4, 2), (256, 6, 2), (512, 3, 2)]


def make_resnet50_params(pg):
    p = {'conv1': pg.conv(64, 3, 7, 7), 'layers': []}
    inplanes = 64
    for planes, blocks, _ in _RESNET50_CFG:
        layer = []
        for b in range(blocks):
            blk = {'conv1': pg.conv(planes, inplanes, 1, 1),
                   'conv2': pg.conv(planes, planes, 3, 3),
                   'conv3': pg.conv(planes * 4, planes, 1, 1)}
            if b == 0:
                blk['down'] = pg.conv(planes * 4, inplanes, 1, 1)
            layer.append(blk)
            inplanes = planes * 4
        p['layers'].append(layer)
    return p


def make_neck_params(pg, channels=(2048, 1024, 512, 256), lat=128):
    p = {'lat': [], 'ud': []}
    for c in channels:
        p['lat'].append({'w': pg.conv(lat, c, 1, 1), 'b': pg.bias(lat, c)})
    for _ in range(len(channels) - 1):
        p['ud'].append({'w': pg.conv(lat, lat, 3, 3), 'b': pg.bias(lat, lat * 9)})
    n = lat * len(channels)
    p['post1'] = {'w': pg.conv(1024, n, 3, 3), 'b': pg.bias(1024, n * 9)}
    p['post2'] = {'w': pg.conv(2048, 1024, 3, 3), 'b': pg.bias(2048, 1024 * 9)}
    return p


# ----------------------------------------------------------------------------
# Forward passes (all activations NHWC)
# ----------------------------------------------------------------------------
_FBN_SCALE = float(1.0 / np.sqrt(1.0 + 1e-5))   # FrozenBatchNorm2d default buffers
_BN_SCALE = float(1.0 / np.sqrt(1.0 + 1e-5))    # eval-mode nn.BatchNorm2d default


def _fbn(c):
    # TODO(synk): with a real checkpoint, bn1/bn2/bn3 need distinct per-channel vectors.
    return jnp.full((c,), _FBN_SCALE, jnp.float32), jnp.zeros((c,), jnp.float32)


def resnet_forward(x, p):
    """x: NHWC. Returns [layer4, layer3, layer2, layer1] NHWC feature maps."""
    s, b0 = _fbn(64)
    x = conv2d(x, p['conv1'], stride=2, padding=3, scale=s, bias=b0, relu=True)
    x = maxpool3x3_s2(x)

    feats = []
    for li, layer in enumerate(p['layers']):
        layer_stride = _RESNET50_CFG[li][2]
        for bi, blk in enumerate(layer):
            stride = layer_stride if bi == 0 else 1
            planes = blk['conv1'].shape[0]
            out_c = blk['conv3'].shape[0]
            sp, bp = _fbn(planes)
            so, bo = _fbn(out_c)
            if 'down' in blk:
                identity = conv2d(x, blk['down'], stride=stride,
                                  scale=so, bias=bo, relu=False)
            else:
                identity = x
            h = conv2d(x, blk['conv1'], scale=sp, bias=bp, relu=True)
            h = conv2d(h, blk['conv2'], stride=stride, padding=1,
                       scale=sp, bias=bp, relu=True)
            x = conv2d(h, blk['conv3'], scale=so, bias=bo,
                       residual=identity, relu=True)
        feats.append(x)
    # BackboneBase.forward order: [layer4, layer3, layer2, layer1]
    return [feats[3], feats[2], feats[1], feats[0]]


def neck_forward(feats, p, fusion_size=32, stride_flag=True):
    n_levels = 4
    assert len(feats) == n_levels
    feats = list(feats)
    for i in range(n_levels):
        feats[i] = conv2d(feats[i], p['lat'][i]['w'], bias=p['lat'][i]['b'])

    Out = []
    out = feats[0]
    Out.append(bilinear_resize(out, fusion_size, fusion_size))
    for i in range(1, n_levels):
        H, W = feats[i].shape[1], feats[i].shape[2]
        up = bilinear_resize(out, H, W) + feats[i]            # upsample_add
        out = conv2d(up, p['ud'][i - 1]['w'], bias=p['ud'][i - 1]['b'], padding=1)
        Out.append(bilinear_resize(out, fusion_size, fusion_size))
    out = jnp.concatenate(Out, axis=-1)                        # (B, 32, 32, 512)

    # post_conv: Conv+BN(eval)+ReLU  x2  (BN folded into weights/bias)
    out = conv2d(out, p['post1']['w'], stride=2, padding=1,
                 scale=jnp.full((1024,), _BN_SCALE, jnp.float32),
                 bias=p['post1']['b'] * _BN_SCALE, relu=True)
    s2 = 2 if stride_flag else 1
    out = conv2d(out, p['post2']['w'], stride=s2, padding=1,
                 scale=jnp.full((2048,), _BN_SCALE, jnp.float32),
                 bias=p['post2']['b'] * _BN_SCALE, relu=True)

    pooled = [adaptive_avg_pool(f, 4) for f in feats]
    return out, pooled


def visual_backbone_forward(img, backbone_params, neck_params, stride_flag=True):
    """img: NCHW (PyTorch layout). Returns NCHW outputs."""
    x = jnp.transpose(img, (0, 2, 3, 1))                       # NCHW -> NHWC, once
    feats = resnet_forward(x, backbone_params)
    out, pooled = neck_forward(feats, neck_params, stride_flag=stride_flag)
    out = jnp.transpose(out, (0, 3, 1, 2))
    pooled = [jnp.transpose(f, (0, 3, 1, 2)) for f in pooled]
    return out, pooled


# ----------------------------------------------------------------------------
if __name__ == "__main__":
    key = jax.random.PRNGKey(0)
    k_img, k_params = jax.random.split(key)

    pg = ParamGen(k_params)
    backbone_params = make_resnet50_params(pg)
    neck_params = make_neck_params(pg)

    # small NCHW image (B=1, 3, 64, 64) -> feature pyramid 2/4/8/16 spatial
    img = jax.random.normal(k_img, (1, 3, 64, 64), jnp.float32)

    out, pooled = visual_backbone_forward(img, backbone_params, neck_params,
                                          stride_flag=True)
    jax.block_until_ready(out)
    for f in pooled:
        jax.block_until_ready(f)

    assert out.shape == (1, 2048, 8, 8)
    assert all(f.shape == (1, 128, 4, 4) for f in pooled)
    print("KERNEL_OK")
</pallas_src>

<mosaic_0001>
module attributes {stable_mosaic.version = 11 : i64} {
  func.func @kernel(%arg0: i32, %arg1: i32, %arg2: i32, %arg3: memref<512x256xbf16, #tpu.memory_space<vmem>>, %arg4: memref<256x128xbf16, #tpu.memory_space<vmem>>, %arg5: memref<1x128xf32, #tpu.memory_space<vmem>>, %arg6: memref<512x128xf32, #tpu.memory_space<vmem>>, %arg7: memref<512x128xf32, #tpu.memory_space<vmem>>) attributes {dimension_semantics = [#tpu.dimension_semantics<parallel>, #tpu.dimension_semantics<parallel>, #tpu.dimension_semantics<arbitrary>], iteration_bounds = array<i64: 2, 1, 1>, scalar_prefetch = 0 : i64, scratch_operands = 1 : i64, tpu.core_type = #tpu.core_type<tc>, window_params = [{transform_indices = @transform_0, window_bounds = array<i64: 512, 256>}, {transform_indices = @transform_1, window_bounds = array<i64: 256, 128>}, {transform_indices = @transform_2, window_bounds = array<i64: 1, 128>}, {transform_indices = @transform_3, window_bounds = array<i64: 512, 128>}]} {
    %c0_i32 = arith.constant 0 : i32
    %0 = arith.cmpi eq, %arg2, %c0_i32 : i32
    %1 = arith.extui %0 : i1 to i32
    %c0_i32_0 = arith.constant 0 : i32
    %2 = arith.cmpi ne, %1, %c0_i32_0 : i32
    scf.if %2 {
      %cst_10 = arith.constant 0.000000e+00 : f32
      %12 = vector.broadcast %cst_10 : f32 to vector<512x128xf32>
      %c0_11 = arith.constant 0 : index
      %c0_12 = arith.constant 0 : index
      %13 = vector.load %arg7[%c0_11, %c0_12] : memref<512x128xf32, #tpu.memory_space<vmem>>, vector<512x128xf32>
      tpu.vector_store %arg7[%c0_11, %c0_12], %12 {strides = array<i32>} : memref<512x128xf32, #tpu.memory_space<vmem>>, vector<512x128xf32>,
    } else {
    }
    %c0 = arith.constant 0 : index
    %c0_1 = arith.constant 0 : index
    %3 = vector.load %arg7[%c0, %c0_1] : memref<512x128xf32, #tpu.memory_space<vmem>>, vector<512x128xf32>
    %c0_2 = arith.constant 0 : index
    %c0_3 = arith.constant 0 : index
    %4 = vector.load %arg3[%c0_2, %c0_3] : memref<512x256xbf16, #tpu.memory_space<vmem>>, vector<512x256xbf16>
    %c0_4 = arith.constant 0 : index
    %c0_5 = arith.constant 0 : index
    %5 = vector.load %arg4[%c0_4, %c0_5] : memref<256x128xbf16, #tpu.memory_space<vmem>>, vector<256x128xbf16>
    %cst = arith.constant dense<0.000000e+00> : vector<512x128xf32>
    %6 = tpu.matmul %4, %5, %cst {dimension_numbers = #tpu.dot_dimension_numbers<[1], [0], [0], [1], [0, 0, 1, 1], [], []>} : vector<512x256xbf16>, vector<256x128xbf16>, vector<512x128xf32> -> vector<512x128xf32>
    %7 = arith.addf %3, %6 : vector<512x128xf32>
    %c0_6 = arith.constant 0 : index
    %c0_7 = arith.constant 0 : index
    %8 = vector.load %arg7[%c0_6, %c0_7] : memref<512x128xf32, #tpu.memory_space<vmem>>, vector<512x128xf32>
    tpu.vector_store %arg7[%c0_6, %c0_7], %7 {strides = array<i32>} : memref<512x128xf32, #tpu.memory_space<vmem>>, vector<512x128xf32>,
    %c0_i32_8 = arith.constant 0 : i32
    %9 = arith.cmpi eq, %arg2, %c0_i32_8 : i32
    %10 = arith.extui %9 : i1 to i32
    %c0_i32_9 = arith.constant 0 : i32
    %11 = arith.cmpi ne, %10, %c0_i32_9 : i32
    scf.if %11 {
      %c0_10 = arith.constant 0 : index
      %c0_11 = arith.constant 0 : index
      %12 = vector.load %arg7[%c0_10, %c0_11] : memref<512x128xf32, #tpu.memory_space<vmem>>, vector<512x128xf32>
      %c0_12 = arith.constant 0 : index
      %c0_13 = arith.constant 0 : index
      %13 = vector.load %arg5[%c0_12, %c0_13] : memref<1x128xf32, #tpu.memory_space<vmem>>, vector<1x128xf32>
      %14 = vector.broadcast %13 : vector<1x128xf32> to vector<512x128xf32>
      %15 = arith.addf %12, %14 : vector<512x128xf32>
      %cst_14 = arith.constant 0.000000e+00 : f32
      %16 = vector.broadcast %cst_14 : f32 to vector<512x128xf32>
      %17 = arith.maximumf %15, %16 : vector<512x128xf32>
      %c0_15 = arith.constant 0 : index
      %c0_16 = arith.constant 0 : index
      %18 = vector.load %arg6[%c0_15, %c0_16] : memref<512x128xf32, #tpu.memory_space<vmem>>, vector<512x128xf32>
      tpu.vector_store %arg6[%c0_15, %c0_16], %17 {strides = array<i32>} : memref<512x128xf32, #tpu.memory_space<vmem>>, vector<512x128xf32>,
    } else {
    }
    return
  }
  func.func @transform_0(%arg0: i32, %arg1: i32, %arg2: i32) -> (i32, i32) {
    %c0_i32 = arith.constant 0 : i32
    return %arg0, %arg2 : i32, i32
  }
  func.func @transform_1(%arg0: i32, %arg1: i32, %arg2: i32) -> (i32, i32) {
    %c0_i32 = arith.constant 0 : i32
    return %arg2, %arg1 : i32, i32
  }
  func.func @transform_2(%arg0: i32, %arg1: i32, %arg2: i32) -> (i32, i32) {
    %c0_i32 = arith.constant 0 : i32
    %c0_i32_0 = arith.constant 0 : i32
    return %c0_i32, %arg1 : i32, i32
  }
  func.func @transform_3(%arg0: i32, %arg1: i32, %arg2: i32) -> (i32, i32) {
    %c0_i32 = arith.constant 0 : i32
    return %arg0, %arg1 : i32, i32
  }
}

</mosaic_0001>

<llo_original>
// kernel: tpu_custom_call.1
$region0: #{tpu_custom_call.1}
  #allocation0 [shape = 'u32[]', space=smem, size = 0x4, offset = 0x4, fixed_abs, tag = 'smem constant byte address 0x4 - core index']
  #allocation1 [shape = 'u32[144,128]{1,0:T(1,128)}', space=vmem, size = 0x12000, scoped, tag = 'internal scratch']
  #allocation2 [shape = 'f32[512,128]{1,0:T(8,128)}', space=vmem, size = 0x40000, scoped, tag = 'scratch operand']
  %s0 = inlined_call_operand.hbm [shape: bf16[1024,256], index: 0, kind: input, shape index: {}]
  %s1 = inlined_call_operand.hbm [shape: bf16[256,128], index: 1, kind: input, shape index: {}]
  %s2 = inlined_call_operand.vmem [shape: f32[1,128], index: 2, kind: input, shape index: {}]
  %s3 = inlined_call_operand.hbm [shape: f32[1024,128], index: 3, kind: output, shape index: {}]
  %s4 = sld [smem:[#allocation0]]
  $region61: #{tpu_custom_call.1} parent=0
    _
  %s6 = ssub.s32 1, %s4
  %s7 = scalar_select 0, %s6, %s4
  $region1: #{tpu_custom_call.1} parent=0
    #allocation3 [shape = 'u8[524288]{0}', space=vmem, size = 0x80000, scoped, tag = 'input window, operand 0']
    #allocation4 [shape = 's32[2]{0}', space=sflag, size = 0x8, scoped, tag = 'scoped memory for tpu_custom_call.1']
    #allocation5 [shape = 's32[2]{0}', space=sflag, size = 0x8, scoped, tag = 'scoped memory for tpu_custom_call.1']
    #allocation6 [shape = 'u8[65536]{0}', space=vmem, size = 0x10000, scoped, tag = 'input window, operand 1, single buffered']
    #allocation7 [shape = 's32[1]{0}', space=sflag, size = 0x4, scoped, tag = 'scoped memory for tpu_custom_call.1']
    #allocation8 [shape = 'u8[524288]{0}', space=vmem, size = 0x80000, scoped, tag = 'output window, operand 0']
    %8 = vsyncpa [#allocation4], 0
    %s9 = scalar_lea.sflag [#allocation4], 1
    %10 = vsyncpa %s9, 0
    %11 = vsyncpa [#allocation7], 0
    %12 = vsyncpa [#allocation5], 0
    %s13 = scalar_lea.sflag [#allocation5], 1
    %14 = vsyncpa %s13, 0
    loop: start=0, step=1, limit=4
    $region2: #{tpu_custom_call.1} parent=1 // loop_pre_header
      _
    $region3: #{tpu_custom_call.1} parent=1 // loop_header
      %s16 = sphi 0, %s20
      %p17 = scmp.ge.s32.totalorder %s16, 4
      %s23 = sphi 0, %s42
      %s24 = sphi 0, %s38
      %s25 = sphi 0, %s34
      %s26 = sphi 0, %s23
      %s27 = sphi 0, %s24
      %s28 = sphi 0, %s25
      %s29 = sphi 0, %s26
      %s30 = sphi 0, %s27
      %s31 = sphi 0, %s28
      %s47 = sphi 0, %s49
      %s50 = sphi 0, %s47
      %s51 = sphi 0, %s50
      %s67 = sphi 0, %s51
      %s75 = sphi 0, %s77
      %s78 = sphi 0, %s75
      %s79 = sphi 0, %s78
      %s95 = sphi 0, %s79
      %s101 = sphi 0, %s103
      %s104 = sphi 0, %s101
      %s105 = sphi 0, %s104
      %s121 = sphi 0, %s105
      %s129 = sphi 0, %s131
      %s132 = sphi 0, %s129
      %s133 = sphi 0, %s132
      %s149 = sphi 0, %s133
    $region4: #{tpu_custom_call.1} parent=1 // loop_header_branch
      %19 = sbr.rel (%p17) target = $region8
    $region5: #{tpu_custom_call.1} parent=1 // loop_body
      %s21 = ssub.s32 %s16, 1
      %s22 = ssub.s32 %s16, 2
      %s32 = sadd.s32 1, %s25
      %p33 = scmp.ge.s32.totalorder %s32, 1
      %s34 = scalar_select %p33, 0, %s32
      %s35 = sadd.s32 1, %s24
      %s36 = scalar_select %p33, %s35, %s24
      %p37 = scmp.ge.s32.totalorder %s36, 1
      %s38 = scalar_select %p37, 0, %s36
      %s39 = sadd.s32 1, %s23
      %s40 = scalar_select %p37, %s39, %s23
      %p41 = scmp.ge.s32.totalorder %s40, 2
      %s42 = scalar_select %p41, 0, %s40
      %s43 = ssub.s32 %s23, %s42
      %s44 = ssub.s32 %s25, %s34
      %s45 = sor.u32 %s43, %s44
      %p46 = scmp.eq.s32.totalorder %s45, 0
      %s48 = sadd.s32 %s47, 1
      %s49 = scalar_select %p46, %s47, %s48
      %p52 = pneg %p46
      %p53 = scmp.eq.s32.totalorder %s16, 1
      %p54 = por %p52, %p53
      %p55 = scmp.ne.s32.totalorder %s47, %s50
      %p56 = scmp.eq.s32.totalorder %s16, 0
      %p57 = por %p55, %p56
      %p58 = scmp.ne.s32.totalorder %s47, %s50
      %p59 = scmp.eq.s32.totalorder %s21, 1
      %p60 = por %p58, %p59
      %p61 = scmp.ne.s32.totalorder %s50, %s51
      %p62 = scmp.eq.s32.totalorder %s21, 0
      %p63 = por %p61, %p62
      %p64 = scmp.ne.s32.totalorder %s50, %s51
      %p65 = scmp.eq.s32.totalorder %s22, 1
      %p66 = por %p64, %p65
      %p68 = scmp.ne.s32.totalorder %s51, %s67
      %p69 = scmp.eq.s32.totalorder %s22, 0
      %p70 = por %p68, %p69
      %s71 = ssub.s32 %s25, %s34
      %s72 = ssub.s32 %s24, %s38
      %s73 = sor.u32 %s71, %s72
      %p74 = scmp.eq.s32.totalorder %s73, 0
      %s76 = sadd.s32 %s75, 1
      %s77 = scalar_select %p74, %s75, %s76
      %p80 = pneg %p74
      %p81 = scmp.eq.s32.totalorder %s16, 1
      %p82 = por %p80, %p81
      %p83 = scmp.ne.s32.totalorder %s75, %s78
      %p84 = scmp.eq.s32.totalorder %s16, 0
      %p85 = por %p83, %p84
      %p86 = scmp.ne.s32.totalorder %s75, %s78
      %p87 = scmp.eq.s32.totalorder %s21, 1
      %p88 = por %p86, %p87
      %p89 = scmp.ne.s32.totalorder %s78, %s79
      %p90 = scmp.eq.s32.totalorder %s21, 0
      %p91 = por %p89, %p90
      %p92 = scmp.ne.s32.totalorder %s78, %s79
      %p93 = scmp.eq.s32.totalorder %s22, 1
      %p94 = por %p92, %p93
      %p96 = scmp.ne.s32.totalorder %s79, %s95
      %p97 = scmp.eq.s32.totalorder %s22, 0
      %p98 = por %p96, %p97
      %s99 = ssub.s32 %s24, %s38
      %p100 = scmp.eq.s32.totalorder %s99, 0
      %s102 = sadd.s32 %s101, 1
      %s103 = scalar_select %p100, %s101, %s102
      %p106 = pneg %p100
      %p107 = scmp.eq.s32.totalorder %s16, 1
      %p108 = por %p106, %p107
      %p109 = scmp.ne.s32.totalorder %s101, %s104
      %p110 = scmp.eq.s32.totalorder %s16, 0
      %p111 = por %p109, %p110
      %p112 = scmp.ne.s32.totalorder %s101, %s104
      %p113 = scmp.eq.s32.totalorder %s21, 1
      %p114 = por %p112, %p113
      %p115 = scmp.ne.s32.totalorder %s104, %s105
      %p116 = scmp.eq.s32.totalorder %s21, 0
      %p117 = por %p115, %p116
      %p118 = scmp.ne.s32.totalorder %s104, %s105
      %p119 = scmp.eq.s32.totalorder %s22, 1
      %p120 = por %p118, %p119
      %p122 = scmp.ne.s32.totalorder %s105, %s121
      %p123 = scmp.eq.s32.totalorder %s22, 0
      %p124 = por %p122, %p123
      %s125 = ssub.s32 %s23, %s42
      %s126 = ssub.s32 %s24, %s38
      %s127 = sor.u32 %s125, %s126
      %p128 = scmp.eq.s32.totalorder %s127, 0
      %s130 = sadd.s32 %s129, 1
      %s131 = scalar_select %p128, %s129, %s130
      %p134 = pneg %p128
      %p135 = scmp.eq.s32.totalorder %s16, 1
      %p136 = por %p134, %p135
      %p137 = scmp.ne.s32.totalorder %s129, %s132
      %p138 = scmp.eq.s32.totalorder %s16, 0
      %p139 = por %p137, %p138
      %p140 = scmp.ne.s32.totalorder %s129, %s132
      %p141 = scmp.eq.s32.totalorder %s21, 1
      %p142 = por %p140, %p141
      %p143 = scmp.ne.s32.totalorder %s132, %s133
      %p144 = scmp.eq.s32.totalorder %s21, 0
      %p145 = por %p143, %p144
      %p146 = scmp.ne.s32.totalorder %s132, %s133
      %p147 = scmp.eq.s32.totalorder %s22, 1
      %p148 = por %p146, %p147
      %p150 = scmp.ne.s32.totalorder %s133, %s149
      %p151 = scmp.eq.s32.totalorder %s22, 0
      %p152 = por %p150, %p151
      %p153 = scmp.le.s32.totalorder 1, %s16
      %p154 = scmp.lt.s32.totalorder %s16, 3
      %p155 = pnand %p153, %p154
      %p156 = pneg %p155
      // Predicated region
      $region9: #{tpu_custom_call.1} parent=5 // pred_check
        _
      $region10: #{tpu_custom_call.1} parent=5 // pred_check_branch
        %158 = sbr.rel (%p155) target = $region12
      $region11: #{tpu_custom_call.1} parent=5 // pred_region
        %s159 = ssub.s32 %s16, 1
        // Predicated region
        $region13: #{tpu_custom_call.1} parent=11 // pred_check
          %p160 = pneg %p91
        $region14: #{tpu_custom_call.1} parent=11 // pred_check_branch
          %162 = sbr.rel (%p160) target = $region16
        $region15: #{tpu_custom_call.1} parent=11 // pred_region
          %s163 = smul.u32 32, %s28
          %s165 = ssub.s32 2048, 2048
          %166 = vsyncadd [#allocation7], %s165
          %s167 = sadd.s32 %s27, %s163
          %s168 = smul.addr %s167, 64
          %s169 = scalar_lea.hbm %s1, %s168
          %s170 = sshll.u32 [#allocation6], 4
          %s171 = int_to_ptr.vmem [resolvable:$true] %s170
          %176 = dma.hbm_to_vmem [thread:$0]  %s169, 2048, %s171, [#allocation7], 64, 64, 4
        $region16: #{tpu_custom_call.1} parent=11 // pred_fallthru
          _
        // Predicated region
        $region17: #{tpu_custom_call.1} parent=11 // pred_check
          %p177 = pneg %p117
        $region18: #{tpu_custom_call.1} parent=11 // pred_check_branch
          %179 = sbr.rel (%p177) target = $region20
        $region19: #{tpu_custom_call.1} parent=11 // pred_region
          %p180 = scmp.lt.s32.totalorder %s27, 0
          %s181 = scalar_select %p180, %s27, 0
          %s182 = scalar_lea.vmem %s2, %s181
        $region20: #{tpu_custom_call.1} parent=11 // pred_fallthru
          _
      $region12: #{tpu_custom_call.1} parent=5 // pred_fallthru
        _
      %p183 = scmp.lt.s32.totalorder %s16, 2
      // Predicated region
      $region21: #{tpu_custom_call.1} parent=5 // pred_check
        %p184 = pneg %p183
      $region22: #{tpu_custom_call.1} parent=5 // pred_check_branch
        %186 = sbr.rel (%p184) target = $region24
      $region23: #{tpu_custom_call.1} parent=5 // pred_region
        // Predicated region
        $region25: #{tpu_custom_call.1} parent=23 // pred_check
          %p187 = pneg %p57
        $region26: #{tpu_custom_call.1} parent=23 // pred_check_branch
          %189 = sbr.rel (%p187) target = $region28
        $region27: #{tpu_custom_call.1} parent=23 // pred_region
          %s190 = sand.u32 %s47, 1
          %s191 = scalar_lea.sflag [#allocation4], %s190
          %s192 = sand.u32 %s47, 1
          %s193 = smul.addr %s192, 512
          %s194 = scalar_lea.vmem [#allocation3], %s193
          %s195 = smul.u32 64, %s23
          %s196 = smul.u32 2, %s25
          %s198 = ssub.s32 8192, 8192
          %199 = vsyncadd %s191, %s198
          %s200 = smul.addr %s195, 2
          %s201 = sadd.s32 %s196, %s200
          %s202 = smul.addr %s201, 64
          %s203 = scalar_lea.hbm %s0, %s202
          %s204 = sshll.u32 %s194, 4
          %s205 = int_to_ptr.vmem [resolvable:$true] %s204
          %210 = dma.hbm_to_vmem [thread:$0]  %s203, 8192, %s205, %s191, 128, 128, 8
        $region28: #{tpu_custom_call.1} parent=23 // pred_fallthru
          _
      $region24: #{tpu_custom_call.1} parent=5 // pred_fallthru
        _
      %p211 = scmp.le.s32.totalorder 1, %s16
      %p212 = scmp.lt.s32.totalorder %s16, 3
      %p213 = pnand %p211, %p212
      %p214 = pneg %p213
      // Predicated region
      $region29: #{tpu_custom_call.1} parent=5 // pred_check
        _
      $region30: #{tpu_custom_call.1} parent=5 // pred_check_branch
        %216 = sbr.rel (%p213) target = $region32
      $region31: #{tpu_custom_call.1} parent=5 // pred_region
        %s217 = ssub.s32 %s16, 1
        %s218 = sand.u32 %s50, 1
        %s219 = scalar_lea.sflag [#allocation4], %s218
        %s220 = sand.u32 %s50, 1
        %s221 = smul.addr %s220, 512
        %s222 = scalar_lea.vmem [#allocation3], %s221
        // Predicated region
        $region33: #{tpu_custom_call.1} parent=31 // pred_check
          %p223 = pneg %p63
        $region34: #{tpu_custom_call.1} parent=31 // pred_check_branch
          %225 = sbr.rel (%p223) target = $region36
        $region35: #{tpu_custom_call.1} parent=31 // pred_region
          %226 = dma.done %s219, 8192
        $region36: #{tpu_custom_call.1} parent=31 // pred_fallthru
          _
        // Predicated region
        $region37: #{tpu_custom_call.1} parent=31 // pred_check
          %p227 = pneg %p91
        $region38: #{tpu_custom_call.1} parent=31 // pred_check_branch
          %229 = sbr.rel (%p227) target = $region40
        $region39: #{tpu_custom_call.1} parent=31 // pred_region
          %230 = dma.done [#allocation7], 2048
        $region40: #{tpu_custom_call.1} parent=31 // pred_fallthru
          _
        %s231 = sand.u32 %s50, 1
        %s232 = scalar_lea.sflag [#allocation4], %s231
        %s233 = sand.u32 %s50, 1
        %s234 = smul.addr %s233, 512
        %s235 = scalar_lea.vmem [#allocation3], %s234
        %p236 = pneg %p63
        %p237 = pneg %p60
        %p238 = pneg %p91
        %p239 = pneg %p88
        %p240 = scmp.lt.s32.totalorder %s27, 0
        %s241 = scalar_select %p240, %s27, 0
        %s242 = scalar_lea.vmem %s2, %s241
        %p243 = pneg %p117
        %p244 = pneg %p114
        %p245 = pneg %p145
        %p246 = pneg %p142
        %s247 = sand.u32 %s132, 1
        %s248 = scalar_lea.sflag [#allocation5], %s247
        %s249 = sand.u32 %s132, 1
        %s250 = smul.addr %s249, 512
        %s251 = scalar_lea.vmem [#allocation8], %s250
        %s252 = smul.u32 64, %s26
        %s253 = smul.u32 2, %s28
        %s254 = smul.u32 32, %s28
        %p255 = scmp.lt.s32.totalorder %s27, 0
        %s256 = scalar_select %p255, %s27, 0
        %s257 = scalar_lea.vmem %s2, %s256
        %s258 = smul.u32 64, %s26
        %p260 = scmp.eq.s32.totalorder %s28, 0
        // Predicated region
        $region41: #{tpu_custom_call.1} parent=31 // pred_check
          %p261 = pneg %p260
        $region42: #{tpu_custom_call.1} parent=31 // pred_check_branch
          %263 = sbr.rel (%p261) target = $region44
        $region43: #{tpu_custom_call.1} parent=31 // pred_region
          %264 = vst [vmem:[#allocation2] sm:$0xff] 0.0
          %265 = vst [vmem:[#allocation2 + $0x8] sm:$0xff] 0.0
          %266 = vst [vmem:[#allocation2 + $0x10] sm:$0xff] 0.0
          %267 = vst [vmem:[#allocation2 + $0x18] sm:$0xff] 0.0
          %268 = vst [vmem:[#allocation2 + $0x20] sm:$0xff] 0.0
          %269 = vst [vmem:[#allocation2 + $0x28] sm:$0xff] 0.0
          %270 = vst [vmem:[#allocation2 + $0x30] sm:$0xff] 0.0
          %271 = vst [vmem:[#allocation2 + $0x38] sm:$0xff] 0.0
          %272 = vst [vmem:[#allocation2 + $0x40] sm:$0xff] 0.0
          %273 = vst [vmem:[#allocation2 + $0x48] sm:$0xff] 0.0
          %274 = vst [vmem:[#allocation2 + $0x50] sm:$0xff] 0.0
          %275 = vst [vmem:[#allocation2 + $0x58] sm:$0xff] 0.0
          %276 = vst [vmem:[#allocation2 + $0x60] sm:$0xff] 0.0
          %277 = vst [vmem:[#allocation2 + $0x68] sm:$0xff] 0.0
          %278 = vst [vmem:[#allocation2 + $0x70] sm:$0xff] 0.0
          %279 = vst [vmem:[#allocation2 + $0x78] sm:$0xff] 0.0
          %280 = vst [vmem:[#allocation2 + $0x80] sm:$0xff] 0.0
          %281 = vst [vmem:[#allocation2 + $0x88] sm:$0xff] 0.0
          %282 = vst [vmem:[#allocation2 + $0x90] sm:$0xff] 0.0
          %283 = vst [vmem:[#allocation2 + $0x98] sm:$0xff] 0.0
          %284 = vst [vmem:[#allocation2 + $0xa0] sm:$0xff] 0.0
          %285 = vst [vmem:[#allocation2 + $0xa8] sm:$0xff] 0.0
          %286 = vst [vmem:[#allocation2 + $0xb0] sm:$0xff] 0.0
          %287 = vst [vmem:[#allocation2 + $0xb8] sm:$0xff] 0.0
          %288 = vst [vmem:[#allocation2 + $0xc0] sm:$0xff] 0.0
          %289 = vst [vmem:[#allocation2 + $0xc8] sm:$0xff] 0.0
          %290 = vst [vmem:[#allocation2 + $0xd0] sm:$0xff] 0.0
          %291 = vst [vmem:[#allocation2 + $0xd8] sm:$0xff] 0.0
          %292 = vst [vmem:[#allocation2 + $0xe0] sm:$0xff] 0.0
          %293 = vst [vmem:[#allocation2 + $0xe8] sm:$0xff] 0.0
          %294 = vst [vmem:[#allocation2 + $0xf0] sm:$0xff] 0.0
          %295 = vst [vmem:[#allocation2 + $0xf8] sm:$0xff] 0.0
          %296 = vst [vmem:[#allocation2 + $0x100] sm:$0xff] 0.0
          %297 = vst [vmem:[#allocation2 + $0x108] sm:$0xff] 0.0
          %298 = vst [vmem:[#allocation2 + $0x110] sm:$0xff] 0.0
          %299 = vst [vmem:[#allocation2 + $0x118] sm:$0xff] 0.0
          %300 = vst [vmem:[#allocation2 + $0x120] sm:$0xff] 0.0
          %301 = vst [vmem:[#allocation2 + $0x128] sm:$0xff] 0.0
          %302 = vst [vmem:[#allocation2 + $0x130] sm:$0xff] 0.0
          %303 = vst [vmem:[#allocation2 + $0x138] sm:$0xff] 0.0
          %304 = vst [vmem:[#allocation2 + $0x140] sm:$0xff] 0.0
          %305 = vst [vmem:[#allocation2 + $0x148] sm:$0xff] 0.0
          %306 = vst [vmem:[#allocation2 + $0x150] sm:$0xff] 0.0
          %307 = vst [vmem:[#allocation2 + $0x158] sm:$0xff] 0.0
          %308 = vst [vmem:[#allocation2 + $0x160] sm:$0xff] 0.0
          %309 = vst [vmem:[#allocation2 + $0x168] sm:$0xff] 0.0
          %310 = vst [vmem:[#allocation2 + $0x170] sm:$0xff] 0.0
          %311 = vst [vmem:[#allocation2 + $0x178] sm:$0xff] 0.0
          %312 = vst [vmem:[#allocation2 + $0x180] sm:$0xff] 0.0
          %313 = vst [vmem:[#allocation2 + $0x188] sm:$0xff] 0.0
          %314 = vst [vmem:[#allocation2 + $0x190] sm:$0xff] 0.0
          %315 = vst [vmem:[#allocation2 + $0x198] sm:$0xff] 0.0
          %316 = vst [vmem:[#allocation2 + $0x1a0] sm:$0xff] 0.0
          %317 = vst [vmem:[#allocation2 + $0x1a8] sm:$0xff] 0.0
          %318 = vst [vmem:[#allocation2 + $0x1b0] sm:$0xff] 0.0
          %319 = vst [vmem:[#allocation2 + $0x1b8] sm:$0xff] 0.0
          %320 = vst [vmem:[#allocation2 + $0x1c0] sm:$0xff] 0.0
          %321 = vst [vmem:[#allocation2 + $0x1c8] sm:$0xff] 0.0
          %322 = vst [vmem:[#allocation2 + $0x1d0] sm:$0xff] 0.0
          %323 = vst [vmem:[#allocation2 + $0x1d8] sm:$0xff] 0.0
          %324 = vst [vmem:[#allocation2 + $0x1e0] sm:$0xff] 0.0
          %325 = vst [vmem:[#allocation2 + $0x1e8] sm:$0xff] 0.0
          %326 = vst [vmem:[#allocation2 + $0x1f0] sm:$0xff] 0.0
          %327 = vst [vmem:[#allocation2 + $0x1f8] sm:$0xff] 0.0
        $region44: #{tpu_custom_call.1} parent=31 // pred_fallthru
          _
        %v328 = vld [vmem:[#allocation2] sm:$0xff]
        %v329 = vld [vmem:[#allocation2 + $0x8] sm:$0xff]
        %v330 = vld [vmem:[#allocation2 + $0x10] sm:$0xff]
        %v331 = vld [vmem:[#allocation2 + $0x18] sm:$0xff]
        %v332 = vld [vmem:[#allocation2 + $0x20] sm:$0xff]
        %v333 = vld [vmem:[#allocation2 + $0x28] sm:$0xff]
        %v334 = vld [vmem:[#allocation2 + $0x30] sm:$0xff]
        %v335 = vld [vmem:[#allocation2 + $0x38] sm:$0xff]
        %v336 = vld [vmem:[#allocation2 + $0x40] sm:$0xff]
        %v337 = vld [vmem:[#allocation2 + $0x48] sm:$0xff]
        %v338 = vld [vmem:[#allocation2 + $0x50] sm:$0xff]
        %v339 = vld [vmem:[#allocation2 + $0x58] sm:$0xff]
        %v340 = vld [vmem:[#allocation2 + $0x60] sm:$0xff]
        %v341 = vld [vmem:[#allocation2 + $0x68] sm:$0xff]
        %v342 = vld [vmem:[#allocation2 + $0x70] sm:$0xff]
        %v343 = vld [vmem:[#allocation2 + $0x78] sm:$0xff]
        %v344 = vld [vmem:[#allocation2 + $0x80] sm:$0xff]
        %v345 = vld [vmem:[#allocation2 + $0x88] sm:$0xff]
        %v346 = vld [vmem:[#allocation2 + $0x90] sm:$0xff]
        %v347 = vld [vmem:[#allocation2 + $0x98] sm:$0xff]
        %v348 = vld [vmem:[#allocation2 + $0xa0] sm:$0xff]
        %v349 = vld [vmem:[#allocation2 + $0xa8] sm:$0xff]
        %v350 = vld [vmem:[#allocation2 + $0xb0] sm:$0xff]
        %v351 = vld [vmem:[#allocation2 + $0xb8] sm:$0xff]
        %v352 = vld [vmem:[#allocation2 + $0xc0] sm:$0xff]
        %v353 = vld [vmem:[#allocation2 + $0xc8] sm:$0xff]
        %v354 = vld [vmem:[#allocation2 + $0xd0] sm:$0xff]
        %v355 = vld [vmem:[#allocation2 + $0xd8] sm:$0xff]
        %v356 = vld [vmem:[#allocation2 + $0xe0] sm:$0xff]
        %v357 = vld [vmem:[#allocation2 + $0xe8] sm:$0xff]
        %v358 = vld [vmem:[#allocation2 + $0xf0] sm:$0xff]
        %v359 = vld [vmem:[#allocation2 + $0xf8] sm:$0xff]
        %v360 = vld [vmem:[#allocation2 + $0x100] sm:$0xff]
        %v361 = vld [vmem:[#allocation2 + $0x108] sm:$0xff]
        %v362 = vld [vmem:[#allocation2 + $0x110] sm:$0xff]
        %v363 = vld [vmem:[#allocation2 + $0x118] sm:$0xff]
        %v364 = vld [vmem:[#allocation2 + $0x120] sm:$0xff]
        %v365 = vld [vmem:[#allocation2 + $0x128] sm:$0xff]
        %v366 = vld [vmem:[#allocation2 + $0x130] sm:$0xff]
        %v367 = vld [vmem:[#allocation2 + $0x138] sm:$0xff]
        %v368 = vld [vmem:[#allocation2 + $0x140] sm:$0xff]
        %v369 = vld [vmem:[#allocation2 + $0x148] sm:$0xff]
        %v370 = vld [vmem:[#allocation2 + $0x150] sm:$0xff]
        %v371 = vld [vmem:[#allocation2 + $0x158] sm:$0xff]
        %v372 = vld [vmem:[#allocation2 + $0x160] sm:$0xff]
        %v373 = vld [vmem:[#allocation2 + $0x168] sm:$0xff]
        %v374 = vld [vmem:[#allocation2 + $0x170] sm:$0xff]
        %v375 = vld [vmem:[#allocation2 + $0x178] sm:$0xff]
        %v376 = vld [vmem:[#allocation2 + $0x180] sm:$0xff]
        %v377 = vld [vmem:[#allocation2 + $0x188] sm:$0xff]
        %v378 = vld [vmem:[#allocation2 + $0x190] sm:$0xff]
        %v379 = vld [vmem:[#allocation2 + $0x198] sm:$0xff]
        %v380 = vld [vmem:[#allocation2 + $0x1a0] sm:$0xff]
        %v381 = vld [vmem:[#allocation2 + $0x1a8] sm:$0xff]
        %v382 = vld [vmem:[#allocation2 + $0x1b0] sm:$0xff]
        %v383 = vld [vmem:[#allocation2 + $0x1b8] sm:$0xff]
        %v384 = vld [vmem:[#allocation2 + $0x1c0] sm:$0xff]
        %v385 = vld [vmem:[#allocation2 + $0x1c8] sm:$0xff]
        %v386 = vld [vmem:[#allocation2 + $0x1d0] sm:$0xff]
        %v387 = vld [vmem:[#allocation2 + $0x1d8] sm:$0xff]
        %v388 = vld [vmem:[#allocation2 + $0x1e0] sm:$0xff]
        %v389 = vld [vmem:[#allocation2 + $0x1e8] sm:$0xff]
        %v390 = vld [vmem:[#allocation2 + $0x1f0] sm:$0xff]
        %v391 = vld [vmem:[#allocation2 + $0x1f8] sm:$0xff]
        %v392 = vld [vmem:[%s222] sm:$0xff]
        %v393 = vld [vmem:[%s222 + $0x8] sm:$0xff]
        %v394 = vld [vmem:[%s222 + $0x10] sm:$0xff]
        %v395 = vld [vmem:[%s222 + $0x18] sm:$0xff]
        %v396 = vld [vmem:[%s222 + $0x20] sm:$0xff]
        %v397 = vld [vmem:[%s222 + $0x28] sm:$0xff]
        %v398 = vld [vmem:[%s222 + $0x30] sm:$0xff]
        %v399 = vld [vmem:[%s222 + $0x38] sm:$0xff]
        %v400 = vld [vmem:[%s222 + $0x40] sm:$0xff]
        %v401 = vld [vmem:[%s222 + $0x48] sm:$0xff]
        %v402 = vld [vmem:[%s222 + $0x50] sm:$0xff]
        %v403 = vld [vmem:[%s222 + $0x58] sm:$0xff]
        %v404 = vld [vmem:[%s222 + $0x60] sm:$0xff]
        %v405 = vld [vmem:[%s222 + $0x68] sm:$0xff]
        %v406 = vld [vmem:[%s222 + $0x70] sm:$0xff]
        %v407 = vld [vmem:[%s222 + $0x78] sm:$0xff]
        %v408 = vld [vmem:[%s222 + $0x80] sm:$0xff]
        %v409 = vld [vmem:[%s222 + $0x88] sm:$0xff]
        %v410 = vld [vmem:[%s222 + $0x90] sm:$0xff]
        %v411 = vld [vmem:[%s222 + $0x98] sm:$0xff]
        %v412 = vld [vmem:[%s222 + $0xa0] sm:$0xff]
        %v413 = vld [vmem:[%s222 + $0xa8] sm:$0xff]
        %v414 = vld [vmem:[%s222 + $0xb0] sm:$0xff]
        %v415 = vld [vmem:[%s222 + $0xb8] sm:$0xff]
        %v416 = vld [vmem:[%s222 + $0xc0] sm:$0xff]
        %v417 = vld [vmem:[%s222 + $0xc8] sm:$0xff]
        %v418 = vld [vmem:[%s222 + $0xd0] sm:$0xff]
        %v419 = vld [vmem:[%s222 + $0xd8] sm:$0xff]
        %v420 = vld [vmem:[%s222 + $0xe0] sm:$0xff]
        %v421 = vld [vmem:[%s222 + $0xe8] sm:$0xff]
        %v422 = vld [vmem:[%s222 + $0xf0] sm:$0xff]
        %v423 = vld [vmem:[%s222 + $0xf8] sm:$0xff]
        %v424 = vld [vmem:[%s222 + $0x100] sm:$0xff]
        %v425 = vld [vmem:[%s222 + $0x108] sm:$0xff]
        %v426 = vld [vmem:[%s222 + $0x110] sm:$0xff]
        %v427 = vld [vmem:[%s222 + $0x118] sm:$0xff]
        %v428 = vld [vmem:[%s222 + $0x120] sm:$0xff]
        %v429 = vld [vmem:[%s222 + $0x128] sm:$0xff]
        %v430 = vld [vmem:[%s222 + $0x130] sm:$0xff]
        %v431 = vld [vmem:[%s222 + $0x138] sm:$0xff]
        %v432 = vld [vmem:[%s222 + $0x140] sm:$0xff]
        %v433 = vld [vmem:[%s222 + $0x148] sm:$0xff]
        %v434 = vld [vmem:[%s222 + $0x150] sm:$0xff]
        %v435 = vld [vmem:[%s222 + $0x158] sm:$0xff]
        %v436 = vld [vmem:[%s222 + $0x160] sm:$0xff]
        %v437 = vld [vmem:[%s222 + $0x168] sm:$0xff]
        %v438 = vld [vmem:[%s222 + $0x170] sm:$0xff]
        %v439 = vld [vmem:[%s222 + $0x178] sm:$0xff]
        %v440 = vld [vmem:[%s222 + $0x180] sm:$0xff]
        %v441 = vld [vmem:[%s222 + $0x188] sm:$0xff]
        %v442 = vld [vmem:[%s222 + $0x190] sm:$0xff]
        %v443 = vld [vmem:[%s222 + $0x198] sm:$0xff]
        %v444 = vld [vmem:[%s222 + $0x1a0] sm:$0xff]
        %v445 = vld [vmem:[%s222 + $0x1a8] sm:$0xff]
        %v446 = vld [vmem:[%s222 + $0x1b0] sm:$0xff]
        %v447 = vld [vmem:[%s222 + $0x1b8] sm:$0xff]
        %v448 = vld [vmem:[%s222 + $0x1c0] sm:$0xff]
        %v449 = vld [vmem:[%s222 + $0x1c8] sm:$0xff]
        %v450 = vld [vmem:[%s222 + $0x1d0] sm:$0xff]
        %v451 = vld [vmem:[%s222 + $0x1d8] sm:$0xff]
        %v452 = vld [vmem:[%s222 + $0x1e0] sm:$0xff]
        %v453 = vld [vmem:[%s222 + $0x1e8] sm:$0xff]
        %v454 = vld [vmem:[%s222 + $0x1f0] sm:$0xff]
        %v455 = vld [vmem:[%s222 + $0x1f8] sm:$0xff]
        %v456 = vld [vmem:[#allocation6] sm:$0xf]
        %v457 = vld [vmem:[#allocation6 + $0x4] sm:$0xf]
        %v458 = vld [vmem:[#allocation6 + $0x8] sm:$0xf]
        %v459 = vld [vmem:[#allocation6 + $0xc] sm:$0xf]
        %v460 = vld [vmem:[#allocation6 + $0x10] sm:$0xf]
        %v461 = vld [vmem:[#allocation6 + $0x14] sm:$0xf]
        %v462 = vld [vmem:[#allocation6 + $0x18] sm:$0xf]
        %v463 = vld [vmem:[#allocation6 + $0x1c] sm:$0xf]
        %v464 = vld [vmem:[#allocation6 + $0x20] sm:$0xf]
        %v465 = vld [vmem:[#allocation6 + $0x24] sm:$0xf]
        %v466 = vld [vmem:[#allocation6 + $0x28] sm:$0xf]
        %v467 = vld [vmem:[#allocation6 + $0x2c] sm:$0xf]
        %v468 = vld [vmem:[#allocation6 + $0x30] sm:$0xf]
        %v469 = vld [vmem:[#allocation6 + $0x34] sm:$0xf]
        %v470 = vld [vmem:[#allocation6 + $0x38] sm:$0xf]
        %v471 = vld [vmem:[#allocation6 + $0x3c] sm:$0xf]
        %v472 = vld [vmem:[#allocation6 + $0x40] sm:$0xf]
        %v473 = vld [vmem:[#allocation6 + $0x44] sm:$0xf]
        %v474 = vld [vmem:[#allocation6 + $0x48] sm:$0xf]
        %v475 = vld [vmem:[#allocation6 + $0x4c] sm:$0xf]
        %v476 = vld [vmem:[#allocation6 + $0x50] sm:$0xf]
        %v477 = vld [vmem:[#allocation6 + $0x54] sm:$0xf]
        %v478 = vld [vmem:[#allocation6 + $0x58] sm:$0xf]
        %v479 = vld [vmem:[#allocation6 + $0x5c] sm:$0xf]
        %v480 = vld [vmem:[#allocation6 + $0x60] sm:$0xf]
        %v481 = vld [vmem:[#allocation6 + $0x64] sm:$0xf]
        %v482 = vld [vmem:[#allocation6 + $0x68] sm:$0xf]
        %v483 = vld [vmem:[#allocation6 + $0x6c] sm:$0xf]
        %v484 = vld [vmem:[#allocation6 + $0x70] sm:$0xf]
        %v485 = vld [vmem:[#allocation6 + $0x74] sm:$0xf]
        %v486 = vld [vmem:[#allocation6 + $0x78] sm:$0xf]
        %v487 = vld [vmem:[#allocation6 + $0x7c] sm:$0xf]
        %v552 = vunpack.c.l.b16 %v392
        %v553 = vunpack.c.h.b16 %v392
        %v554 = vunpack.c.l.b16 %v393
        %v555 = vunpack.c.h.b16 %v393
        %v556 = vunpack.c.l.b16 %v394
        %v557 = vunpack.c.h.b16 %v394
        %v558 = vunpack.c.l.b16 %v395
        %v559 = vunpack.c.h.b16 %v395
        %v560 = vunpack.c.l.b16 %v396
        %v561 = vunpack.c.h.b16 %v396
        %v562 = vunpack.c.l.b16 %v397
        %v563 = vunpack.c.h.b16 %v397
        %v564 = vunpack.c.l.b16 %v398
        %v565 = vunpack.c.h.b16 %v398
        %v566 = vunpack.c.l.b16 %v399
        %v567 = vunpack.c.h.b16 %v399
        %v568 = vunpack.c.l.b16 %v400
        %v569 = vunpack.c.h.b16 %v400
        %v570 = vunpack.c.l.b16 %v401
        %v571 = vunpack.c.h.b16 %v401
        %v572 = vunpack.c.l.b16 %v402
        %v573 = vunpack.c.h.b16 %v402
        %v574 = vunpack.c.l.b16 %v403
        %v575 = vunpack.c.h.b16 %v403
        %v576 = vunpack.c.l.b16 %v404
        %v577 = vunpack.c.h.b16 %v404
        %v578 = vunpack.c.l.b16 %v405
        %v579 = vunpack.c.h.b16 %v405
        %v580 = vunpack.c.l.b16 %v406
        %v581 = vunpack.c.h.b16 %v406
        %v582 = vunpack.c.l.b16 %v407
        %v583 = vunpack.c.h.b16 %v407
        %v584 = vunpack.c.l.b16 %v408
        %v585 = vunpack.c.h.b16 %v408
        %v586 = vunpack.c.l.b16 %v409
        %v587 = vunpack.c.h.b16 %v409
        %v588 = vunpack.c.l.b16 %v410
        %v589 = vunpack.c.h.b16 %v410
        %v590 = vunpack.c.l.b16 %v411
        %v591 = vunpack.c.h.b16 %v411
        %v592 = vunpack.c.l.b16 %v412
        %v593 = vunpack.c.h.b16 %v412
        %v594 = vunpack.c.l.b16 %v413
        %v595 = vunpack.c.h.b16 %v413
        %v596 = vunpack.c.l.b16 %v414
        %v597 = vunpack.c.h.b16 %v414
        %v598 = vunpack.c.l.b16 %v415
        %v599 = vunpack.c.h.b16 %v415
        %v600 = vunpack.c.l.b16 %v416
        %v601 = vunpack.c.h.b16 %v416
        %v602 = vunpack.c.l.b16 %v417
        %v603 = vunpack.c.h.b16 %v417
        %v604 = vunpack.c.l.b16 %v418
        %v605 = vunpack.c.h.b16 %v418
        %v606 = vunpack.c.l.b16 %v419
        %v607 = vunpack.c.h.b16 %v419
        %v608 = vunpack.c.l.b16 %v420
        %v609 = vunpack.c.h.b16 %v420
        %v610 = vunpack.c.l.b16 %v421
        %v611 = vunpack.c.h.b16 %v421
        %v612 = vunpack.c.l.b16 %v422
        %v613 = vunpack.c.h.b16 %v422
        %v614 = vunpack.c.l.b16 %v423
        %v615 = vunpack.c.h.b16 %v423
        %v616 = vunpack.c.l.b16 %v424
        %v617 = vunpack.c.h.b16 %v424
        %v618 = vunpack.c.l.b16 %v425
        %v619 = vunpack.c.h.b16 %v425
        %v620 = vunpack.c.l.b16 %v426
        %v621 = vunpack.c.h.b16 %v426
        %v622 = vunpack.c.l.b16 %v427
        %v623 = vunpack.c.h.b16 %v427
        %v624 = vunpack.c.l.b16 %v428
        %v625 = vunpack.c.h.b16 %v428
        %v626 = vunpack.c.l.b16 %v429
        %v627 = vunpack.c.h.b16 %v429
        %v628 = vunpack.c.l.b16 %v430
        %v629 = vunpack.c.h.b16 %v430
        %v630 = vunpack.c.l.b16 %v431
        %v631 = vunpack.c.h.b16 %v431
        %v632 = vunpack.c.l.b16 %v432
        %v633 = vunpack.c.h.b16 %v432
        %v634 = vunpack.c.l.b16 %v433
        %v635 = vunpack.c.h.b16 %v433
        %v636 = vunpack.c.l.b16 %v434
        %v637 = vunpack.c.h.b16 %v434
        %v638 = vunpack.c.l.b16 %v435
        %v639 = vunpack.c.h.b16 %v435
        %v640 = vunpack.c.l.b16 %v436
        %v641 = vunpack.c.h.b16 %v436
        %v642 = vunpack.c.l.b16 %v437
        %v643 = vunpack.c.h.b16 %v437
        %v644 = vunpack.c.l.b16 %v438
        %v645 = vunpack.c.h.b16 %v438
        %v646 = vunpack.c.l.b16 %v439
        %v647 = vunpack.c.h.b16 %v439
        %v648 = vunpack.c.l.b16 %v440
        %v649 = vunpack.c.h.b16 %v440
        %v650 = vunpack.c.l.b16 %v441
        %v651 = vunpack.c.h.b16 %v441
        %v652 = vunpack.c.l.b16 %v442
        %v653 = vunpack.c.h.b16 %v442
        %v654 = vunpack.c.l.b16 %v443
        %v655 = vunpack.c.h.b16 %v443
        %v656 = vunpack.c.l.b16 %v444
        %v657 = vunpack.c.h.b16 %v444
        %v658 = vunpack.c.l.b16 %v445
        %v659 = vunpack.c.h.b16 %v445
        %v660 = vunpack.c.l.b16 %v446
        %v661 = vunpack.c.h.b16 %v446
        %v662 = vunpack.c.l.b16 %v447
        %v663 = vunpack.c.h.b16 %v447
        %v664 = vunpack.c.l.b16 %v448
        %v665 = vunpack.c.h.b16 %v448
        %v666 = vunpack.c.l.b16 %v449
        %v667 = vunpack.c.h.b16 %v449
        %v668 = vunpack.c.l.b16 %v450
        %v669 = vunpack.c.h.b16 %v450
        %v670 = vunpack.c.l.b16 %v451
        %v671 = vunpack.c.h.b16 %v451
        %v672 = vunpack.c.l.b16 %v452
        %v673 = vunpack.c.h.b16 %v452
        %v674 = vunpack.c.l.b16 %v453
        %v675 = vunpack.c.h.b16 %v453
        %v676 = vunpack.c.l.b16 %v454
        %v677 = vunpack.c.h.b16 %v454
        %v678 = vunpack.c.l.b16 %v455
        %v679 = vunpack.c.h.b16 %v455
        %v680 = vpack.c.b16 %v554, %v552
        %v681 = vpack.c.b16 %v555, %v553
        %v682 = vpack.c.b16 %v558, %v556
        %v683 = vpack.c.b16 %v559, %v557
        %v684 = vpack.c.b16 %v562, %v560
        %v685 = vpack.c.b16 %v563, %v561
        %v686 = vpack.c.b16 %v566, %v564
        %v687 = vpack.c.b16 %v567, %v565
        %v688 = vpack.c.b16 %v570, %v568
        %v689 = vpack.c.b16 %v571, %v569
        %v690 = vpack.c.b16 %v574, %v572
        %v691 = vpack.c.b16 %v575, %v573
        %v692 = vpack.c.b16 %v578, %v576
        %v693 = vpack.c.b16 %v579, %v577
        %v694 = vpack.c.b16 %v582, %v580
        %v695 = vpack.c.b16 %v583, %v581
        %v696 = vpack.c.b16 %v586, %v584
        %v697 = vpack.c.b16 %v587, %v585
        %v698 = vpack.c.b16 %v590, %v588
        %v699 = vpack.c.b16 %v591, %v589
        %v700 = vpack.c.b16 %v594, %v592
        %v701 = vpack.c.b16 %v595, %v593
        %v702 = vpack.c.b16 %v598, %v596
        %v703 = vpack.c.b16 %v599, %v597
        %v704 = vpack.c.b16 %v602, %v600
        %v705 = vpack.c.b16 %v603, %v601
        %v706 = vpack.c.b16 %v606, %v604
        %v707 = vpack.c.b16 %v607, %v605
        %v708 = vpack.c.b16 %v610, %v608
        %v709 = vpack.c.b16 %v611, %v609
        %v710 = vpack.c.b16 %v614, %v612
        %v711 = vpack.c.b16 %v615, %v613
        %v712 = vpack.c.b16 %v618, %v616
        %v713 = vpack.c.b16 %v619, %v617
        %v714 = vpack.c.b16 %v622, %v620
        %v715 = vpack.c.b16 %v623, %v621
        %v716 = vpack.c.b16 %v626, %v624
        %v717 = vpack.c.b16 %v627, %v625
        %v718 = vpack.c.b16 %v630, %v628
        %v719 = vpack.c.b16 %v631, %v629
        %v720 = vpack.c.b16 %v634, %v632
        %v721 = vpack.c.b16 %v635, %v633
        %v722 = vpack.c.b16 %v638, %v636
        %v723 = vpack.c.b16 %v639, %v637
        %v724 = vpack.c.b16 %v642, %v640
        %v725 = vpack.c.b16 %v643, %v641
        %v726 = vpack.c.b16 %v646, %v644
        %v727 = vpack.c.b16 %v647, %v645
        %v728 = vpack.c.b16 %v650, %v648
        %v729 = vpack.c.b16 %v651, %v649
        %v730 = vpack.c.b16 %v654, %v652
        %v731 = vpack.c.b16 %v655, %v653
        %v732 = vpack.c.b16 %v658, %v656
        %v733 = vpack.c.b16 %v659, %v657
        %v734 = vpack.c.b16 %v662, %v660
        %v735 = vpack.c.b16 %v663, %v661
        %v736 = vpack.c.b16 %v666, %v664
        %v737 = vpack.c.b16 %v667, %v665
        %v738 = vpack.c.b16 %v670, %v668
        %v739 = vpack.c.b16 %v671, %v669
        %v740 = vpack.c.b16 %v674, %v672
        %v741 = vpack.c.b16 %v675, %v673
        %v742 = vpack.c.b16 %v678, %v676
        %v743 = vpack.c.b16 %v679, %v677
        %v840 = vunpack.c.l.b16 %v456
        %v841 = vunpack.c.l.b16 %v457
        %v842 = vunpack.c.l.b16 %v458
        %v843 = vunpack.c.l.b16 %v459
        %v844 = vunpack.c.l.b16 %v460
        %v845 = vunpack.c.l.b16 %v461
        %v846 = vunpack.c.l.b16 %v462
        %v847 = vunpack.c.l.b16 %v463
        %v848 = vunpack.c.l.b16 %v464
        %v849 = vunpack.c.l.b16 %v465
        %v850 = vunpack.c.l.b16 %v466
        %v851 = vunpack.c.l.b16 %v467
        %v852 = vunpack.c.l.b16 %v468
        %v853 = vunpack.c.l.b16 %v469
        %v854 = vunpack.c.l.b16 %v470
        %v855 = vunpack.c.l.b16 %v471
        %v856 = vunpack.c.l.b16 %v472
        %v857 = vunpack.c.l.b16 %v473
        %v858 = vunpack.c.l.b16 %v474
        %v859 = vunpack.c.l.b16 %v475
        %v860 = vunpack.c.l.b16 %v476
        %v861 = vunpack.c.l.b16 %v477
        %v862 = vunpack.c.l.b16 %v478
        %v863 = vunpack.c.l.b16 %v479
        %v864 = vunpack.c.l.b16 %v480
        %v865 = vunpack.c.l.b16 %v481
        %v866 = vunpack.c.l.b16 %v482
        %v867 = vunpack.c.l.b16 %v483
        %v868 = vunpack.c.l.b16 %v484
        %v869 = vunpack.c.l.b16 %v485
        %v870 = vunpack.c.l.b16 %v486
        %v871 = vunpack.c.l.b16 %v487
        %v872 = vpack.c.b16 %v841, %v840
        %v873 = vpack.c.b16 %v843, %v842
        %v874 = vpack.c.b16 %v845, %v844
        %v875 = vpack.c.b16 %v847, %v846
        %v876 = vpack.c.b16 %v849, %v848
        %v877 = vpack.c.b16 %v851, %v850
        %v878 = vpack.c.b16 %v853, %v852
        %v879 = vpack.c.b16 %v855, %v854
        %v880 = vpack.c.b16 %v857, %v856
        %v881 = vpack.c.b16 %v859, %v858
        %v882 = vpack.c.b16 %v861, %v860
        %v883 = vpack.c.b16 %v863, %v862
        %v884 = vpack.c.b16 %v865, %v864
        %v885 = vpack.c.b16 %v867, %v866
        %v886 = vpack.c.b16 %v869, %v868
        %v887 = vpack.c.b16 %v871, %v870
        %904 = vmatprep.subr.bf16.mxu0 0
        %905 = vmatpush1.bf16.msra.mxu0 %v879
        %906 = vmatprep.subr.bf16.mxu0 0
        %907 = vmatpush1.bf16.msra.mxu0 %v878
        %908 = vmatprep.subr.bf16.mxu0 0
        %909 = vmatpush1.bf16.msra.mxu0 %v877
        %910 = vmatprep.subr.bf16.mxu0 0
        %911 = vmatpush1.bf16.msra.mxu0 %v876
        %912 = vmatprep.subr.bf16.mxu0 0
        %913 = vmatpush1.bf16.msra.mxu0 %v875
        %914 = vmatprep.subr.bf16.mxu0 0
        %915 = vmatpush1.bf16.msra.mxu0 %v874
        %916 = vmatprep.subr.bf16.mxu0 0
        %917 = vmatpush1.bf16.msra.mxu0 %v873
        %918 = vmatprep.subr.bf16.mxu0 0
        %919 = vmatpush1.bf16.msra.mxu0 %v872
        %920 = vmatprep.subr.bf16.mxu0 0
        %921 = vmatpush2.bf16.msra.mxu0 %v887
        %922 = vmatprep.subr.bf16.mxu0 0
        %923 = vmatpush2.bf16.msra.mxu0 %v886
        %924 = vmatprep.subr.bf16.mxu0 0
        %925 = vmatpush2.bf16.msra.mxu0 %v885
        %926 = vmatprep.subr.bf16.mxu0 0
        %927 = vmatpush2.bf16.msra.mxu0 %v884
        %928 = vmatprep.subr.bf16.mxu0 0
        %929 = vmatpush2.bf16.msra.mxu0 %v883
        %930 = vmatprep.subr.bf16.mxu0 0
        %931 = vmatpush2.bf16.msra.mxu0 %v882
        %932 = vmatprep.subr.bf16.mxu0 0
        %933 = vmatpush2.bf16.msra.mxu0 %v881
        %934 = vmatprep.subr.bf16.mxu0 0
        %935 = vmatpush2.bf16.msra.mxu0 %v880
        %936 = vmatprep.mubr.bf16.mxu0 %v681
        %937 = vmatmul.mubr.bf16.gmra.mxu0 %v680
        %v938 = vpop.f32.mrf.mxu0
        %v939 = vadd.f32 0.0, %v938
        %v940 = vpop.f32.mrf.mxu0
        %v941 = vpop.f32.mrf.mxu0
        %v942 = vadd.f32 0.0, %v941
        %v943 = vpop.f32.mrf.mxu0
        %944 = vmatprep.mubr.bf16.mxu0 %v683
        %945 = vmatmul.mubr.bf16.gmra.mxu0 %v682
        %v946 = vpop.f32.mrf.mxu0
        %v947 = vadd.f32 0.0, %v946
        %v948 = vpop.f32.mrf.mxu0
        %v949 = vpop.f32.mrf.mxu0
        %v950 = vadd.f32 0.0, %v949
        %v951 = vpop.f32.mrf.mxu0
        %952 = vmatprep.mubr.bf16.mxu0 %v685
        %953 = vmatmul.mubr.bf16.gmra.mxu0 %v684
        %v954 = vpop.f32.mrf.mxu0
        %v955 = vadd.f32 0.0, %v954
        %v956 = vpop.f32.mrf.mxu0
        %v957 = vpop.f32.mrf.mxu0
        %v958 = vadd.f32 0.0, %v957
        %v959 = vpop.f32.mrf.mxu0
        %960 = vmatprep.mubr.bf16.mxu0 %v687
        %961 = vmatmul.mubr.bf16.gmra.mxu0 %v686
        %v962 = vpop.f32.mrf.mxu0
        %v963 = vadd.f32 0.0, %v962
        %v964 = vpop.f32.mrf.mxu0
        %v965 = vpop.f32.mrf.mxu0
        %v966 = vadd.f32 0.0, %v965
        %v967 = vpop.f32.mrf.mxu0
        %968 = vmatprep.mubr.bf16.mxu0 %v689
        %969 = vmatmul.mubr.bf16.gmra.mxu0 %v688
        %v970 = vpop.f32.mrf.mxu0
        %v971 = vadd.f32 0.0, %v970
        %v972 = vpop.f32.mrf.mxu0
        %v973 = vpop.f32.mrf.mxu0
        %v974 = vadd.f32 0.0, %v973
        %v975 = vpop.f32.mrf.mxu0
        %976 = vmatprep.mubr.bf16.mxu0 %v691
        %977 = vmatmul.mubr.bf16.gmra.mxu0 %v690
        %v978 = vpop.f32.mrf.mxu0
        %v979 = vadd.f32 0.0, %v978
        %v980 = vpop.f32.mrf.mxu0
        %v981 = vpop.f32.mrf.mxu0
        %v982 = vadd.f32 0.0, %v981
        %v983 = vpop.f32.mrf.mxu0
        %984 = vmatprep.mubr.bf16.mxu0 %v693
        %985 = vmatmul.mubr.bf16.gmra.mxu0 %v692
        %v986 = vpop.f32.mrf.mxu0
        %v987 = vadd.f32 0.0, %v986
        %v988 = vpop.f32.mrf.mxu0
        %v989 = vpop.f32.mrf.mxu0
        %v990 = vadd.f32 0.0, %v989
        %v991 = vpop.f32.mrf.mxu0
        %992 = vmatprep.mubr.bf16.mxu0 %v695
        %993 = vmatmul.mubr.bf16.gmra.mxu0 %v694
        %v994 = vpop.f32.mrf.mxu0
        %v995 = vadd.f32 0.0, %v994
        %v996 = vpop.f32.mrf.mxu0
        %v997 = vpop.f32.mrf.mxu0
        %v998 = vadd.f32 0.0, %v997
        %v999 = vpop.f32.mrf.mxu0
        %1000 = vmatprep.mubr.bf16.mxu0 %v697
        %1001 = vmatmul.mubr.bf16.gmra.mxu0 %v696
        %v1002 = vpop.f32.mrf.mxu0
        %v1003 = vadd.f32 0.0, %v1002
        %v1004 = vpop.f32.mrf.mxu0
        %v1005 = vpop.f32.mrf.mxu0
        %v1006 = vadd.f32 0.0, %v1005
        %v1007 = vpop.f32.mrf.mxu0
        %1008 = vmatprep.mubr.bf16.mxu0 %v699
        %1009 = vmatmul.mubr.bf16.gmra.mxu0 %v698
        %v1010 = vpop.f32.mrf.mxu0
        %v1011 = vadd.f32 0.0, %v1010
        %v1012 = vpop.f32.mrf.mxu0
        %v1013 = vpop.f32.mrf.mxu0
        %v1014 = vadd.f32 0.0, %v1013
        %v1015 = vpop.f32.mrf.mxu0
        %1016 = vmatprep.mubr.bf16.mxu0 %v701
        %1017 = vmatmul.mubr.bf16.gmra.mxu0 %v700
        %v1018 = vpop.f32.mrf.mxu0
        %v1019 = vadd.f32 0.0, %v1018
        %v1020 = vpop.f32.mrf.mxu0
        %v1021 = vpop.f32.mrf.mxu0
        %v1022 = vadd.f32 0.0, %v1021
        %v1023 = vpop.f32.mrf.mxu0
        %1024 = vmatprep.mubr.bf16.mxu0 %v703
        %1025 = vmatmul.mubr.bf16.gmra.mxu0 %v702
        %v1026 = vpop.f32.mrf.mxu0
        %v1027 = vadd.f32 0.0, %v1026
        %v1028 = vpop.f32.mrf.mxu0
        %v1029 = vpop.f32.mrf.mxu0
        %v1030 = vadd.f32 0.0, %v1029
        %v1031 = vpop.f32.mrf.mxu0
        %1032 = vmatprep.mubr.bf16.mxu0 %v705
        %1033 = vmatmul.mubr.bf16.gmra.mxu0 %v704
        %v1034 = vpop.f32.mrf.mxu0
        %v1035 = vadd.f32 0.0, %v1034
        %v1036 = vpop.f32.mrf.mxu0
        %v1037 = vpop.f32.mrf.mxu0
        %v1038 = vadd.f32 0.0, %v1037
        %v1039 = vpop.f32.mrf.mxu0
        %1040 = vmatprep.mubr.bf16.mxu0 %v707
        %1041 = vmatmul.mubr.bf16.gmra.mxu0 %v706
        %v1042 = vpop.f32.mrf.mxu0
        %v1043 = vadd.f32 0.0, %v1042
        %v1044 = vpop.f32.mrf.mxu0
        %v1045 = vpop.f32.mrf.mxu0
        %v1046 = vadd.f32 0.0, %v1045
        %v1047 = vpop.f32.mrf.mxu0
        %1048 = vmatprep.mubr.bf16.mxu0 %v709
        %1049 = vmatmul.mubr.bf16.gmra.mxu0 %v708
        %v1050 = vpop.f32.mrf.mxu0
        %v1051 = vadd.f32 0.0, %v1050
        %v1052 = vpop.f32.mrf.mxu0
        %v1053 = vpop.f32.mrf.mxu0
        %v1054 = vadd.f32 0.0, %v1053
        %v1055 = vpop.f32.mrf.mxu0
        %1056 = vmatprep.mubr.bf16.mxu0 %v711
        %1057 = vmatmul.mubr.bf16.gmra.mxu0 %v710
        %v1058 = vpop.f32.mrf.mxu0
        %v1059 = vadd.f32 0.0, %v1058
        %v1060 = vpop.f32.mrf.mxu0
        %v1061 = vpop.f32.mrf.mxu0
        %v1062 = vadd.f32 0.0, %v1061
        %v1063 = vpop.f32.mrf.mxu0
        %1064 = vmatprep.mubr.bf16.mxu0 %v713
        %1065 = vmatmul.mubr.bf16.gmra.mxu0 %v712
        %v1066 = vpop.f32.mrf.mxu0
        %v1067 = vadd.f32 0.0, %v1066
        %v1068 = vpop.f32.mrf.mxu0
        %v1069 = vpop.f32.mrf.mxu0
        %v1070 = vadd.f32 0.0, %v1069
        %v1071 = vpop.f32.mrf.mxu0
        %1072 = vmatprep.mubr.bf16.mxu0 %v715
        %1073 = vmatmul.mubr.bf16.gmra.mxu0 %v714
        %v1074 = vpop.f32.mrf.mxu0
        %v1075 = vadd.f32 0.0, %v1074
        %v1076 = vpop.f32.mrf.mxu0
        %v1077 = vpop.f32.mrf.mxu0
        %v1078 = vadd.f32 0.0, %v1077
        %v1079 = vpop.f32.mrf.mxu0
        %1080 = vmatprep.mubr.bf16.mxu0 %v717
        %1081 = vmatmul.mubr.bf16.gmra.mxu0 %v716
        %v1082 = vpop.f32.mrf.mxu0
        %v1083 = vadd.f32 0.0, %v1082
        %v1084 = vpop.f32.mrf.mxu0
        %v1085 = vpop.f32.mrf.mxu0
        %v1086 = vadd.f32 0.0, %v1085
        %v1087 = vpop.f32.mrf.mxu0
        %1088 = vmatprep.mubr.bf16.mxu0 %v719
        %1089 = vmatmul.mubr.bf16.gmra.mxu0 %v718
        %v1090 = vpop.f32.mrf.mxu0
        %v1091 = vadd.f32 0.0, %v1090
        %v1092 = vpop.f32.mrf.mxu0
        %v1093 = vpop.f32.mrf.mxu0
        %v1094 = vadd.f32 0.0, %v1093
        %v1095 = vpop.f32.mrf.mxu0
        %1096 = vmatprep.mubr.bf16.mxu0 %v721
        %1097 = vmatmul.mubr.bf16.gmra.mxu0 %v720
        %v1098 = vpop.f32.mrf.mxu0
        %v1099 = vadd.f32 0.0, %v1098
        %v1100 = vpop.f32.mrf.mxu0
        %v1101 = vpop.f32.mrf.mxu0
        %v1102 = vadd.f32 0.0, %v1101
        %v1103 = vpop.f32.mrf.mxu0
        %1104 = vmatprep.mubr.bf16.mxu0 %v723
        %1105 = vmatmul.mubr.bf16.gmra.mxu0 %v722
        %v1106 = vpop.f32.mrf.mxu0
        %v1107 = vadd.f32 0.0, %v1106
        %v1108 = vpop.f32.mrf.mxu0
        %v1109 = vpop.f32.mrf.mxu0
        %v1110 = vadd.f32 0.0, %v1109
        %v1111 = vpop.f32.mrf.mxu0
        %1112 = vmatprep.mubr.bf16.mxu0 %v725
        %1113 = vmatmul.mubr.bf16.gmra.mxu0 %v724
        %v1114 = vpop.f32.mrf.mxu0
        %v1115 = vadd.f32 0.0, %v1114
        %v1116 = vpop.f32.mrf.mxu0
        %v1117 = vpop.f32.mrf.mxu0
        %v1118 = vadd.f32 0.0, %v1117
        %v1119 = vpop.f32.mrf.mxu0
        %1120 = vmatprep.mubr.bf16.mxu0 %v727
        %1121 = vmatmul.mubr.bf16.gmra.mxu0 %v726
        %v1122 = vpop.f32.mrf.mxu0
        %v1123 = vadd.f32 0.0, %v1122
        %v1124 = vpop.f32.mrf.mxu0
        %v1125 = vpop.f32.mrf.mxu0
        %v1126 = vadd.f32 0.0, %v1125
        %v1127 = vpop.f32.mrf.mxu0
        %1128 = vmatprep.mubr.bf16.mxu0 %v729
        %1129 = vmatmul.mubr.bf16.gmra.mxu0 %v728
        %v1130 = vpop.f32.mrf.mxu0
        %v1131 = vadd.f32 0.0, %v1130
        %v1132 = vpop.f32.mrf.mxu0
        %v1133 = vpop.f32.mrf.mxu0
        %v1134 = vadd.f32 0.0, %v1133
        %v1135 = vpop.f32.mrf.mxu0
        %1136 = vmatprep.mubr.bf16.mxu0 %v731
        %1137 = vmatmul.mubr.bf16.gmra.mxu0 %v730
        %v1138 = vpop.f32.mrf.mxu0
        %v1139 = vadd.f32 0.0, %v1138
        %v1140 = vpop.f32.mrf.mxu0
        %v1141 = vpop.f32.mrf.mxu0
        %v1142 = vadd.f32 0.0, %v1141
        %v1143 = vpop.f32.mrf.mxu0
        %1144 = vmatprep.mubr.bf16.mxu0 %v733
        %1145 = vmatmul.mubr.bf16.gmra.mxu0 %v732
        %v1146 = vpop.f32.mrf.mxu0
        %v1147 = vadd.f32 0.0, %v1146
        %v1148 = vpop.f32.mrf.mxu0
        %v1149 = vpop.f32.mrf.mxu0
        %v1150 = vadd.f32 0.0, %v1149
        %v1151 = vpop.f32.mrf.mxu0
        %1152 = vmatprep.mubr.bf16.mxu0 %v735
        %1153 = vmatmul.mubr.bf16.gmra.mxu0 %v734
        %v1154 = vpop.f32.mrf.mxu0
        %v1155 = vadd.f32 0.0, %v1154
        %v1156 = vpop.f32.mrf.mxu0
        %v1157 = vpop.f32.mrf.mxu0
        %v1158 = vadd.f32 0.0, %v1157
        %v1159 = vpop.f32.mrf.mxu0
        %1160 = vmatprep.mubr.bf16.mxu0 %v737
        %1161 = vmatmul.mubr.bf16.gmra.mxu0 %v736
        %v1162 = vpop.f32.mrf.mxu0
        %v1163 = vadd.f32 0.0, %v1162
        %v1164 = vpop.f32.mrf.mxu0
        %v1165 = vpop.f32.mrf.mxu0
        %v1166 = vadd.f32 0.0, %v1165
        %v1167 = vpop.f32.mrf.mxu0
        %1168 = vmatprep.mubr.bf16.mxu0 %v739
        %1169 = vmatmul.mubr.bf16.gmra.mxu0 %v738
        %v1170 = vpop.f32.mrf.mxu0
        %v1171 = vadd.f32 0.0, %v1170
        %v1172 = vpop.f32.mrf.mxu0
        %v1173 = vpop.f32.mrf.mxu0
        %v1174 = vadd.f32 0.0, %v1173
        %v1175 = vpop.f32.mrf.mxu0
        %1176 = vmatprep.mubr.bf16.mxu0 %v741
        %1177 = vmatmul.mubr.bf16.gmra.mxu0 %v740
        %v1178 = vpop.f32.mrf.mxu0
        %v1179 = vadd.f32 0.0, %v1178
        %v1180 = vpop.f32.mrf.mxu0
        %v1181 = vpop.f32.mrf.mxu0
        %v1182 = vadd.f32 0.0, %v1181
        %v1183 = vpop.f32.mrf.mxu0
        %1184 = vmatprep.mubr.bf16.mxu0 %v743
        %1185 = vmatmul.mubr.bf16.gmra.mxu0 %v742
        %v1186 = vpop.f32.mrf.mxu0
        %v1187 = vadd.f32 0.0, %v1186
        %v1188 = vpop.f32.mrf.mxu0
        %v1189 = vpop.f32.mrf.mxu0
        %v1190 = vadd.f32 0.0, %v1189
        %v1191 = vpop.f32.mrf.mxu0
        %1192 = vdwg.mxu0
        %v1193 = vadd.f32 %v328, %v939
        %v1194 = vadd.f32 %v329, %v942
        %v1195 = vadd.f32 %v330, %v947
        %v1196 = vadd.f32 %v331, %v950
        %v1197 = vadd.f32 %v332, %v955
        %v1198 = vadd.f32 %v333, %v958
        %v1199 = vadd.f32 %v334, %v963
        %v1200 = vadd.f32 %v335, %v966
        %v1201 = vadd.f32 %v336, %v971
        %v1202 = vadd.f32 %v337, %v974
        %v1203 = vadd.f32 %v338, %v979
        %v1204 = vadd.f32 %v339, %v982
        %v1205 = vadd.f32 %v340, %v987
        %v1206 = vadd.f32 %v341, %v990
        %v1207 = vadd.f32 %v342, %v995
        %v1208 = vadd.f32 %v343, %v998
        %v1209 = vadd.f32 %v344, %v1003
        %v1210 = vadd.f32 %v345, %v1006
        %v1211 = vadd.f32 %v346, %v1011
        %v1212 = vadd.f32 %v347, %v1014
        %v1213 = vadd.f32 %v348, %v1019
        %v1214 = vadd.f32 %v349, %v1022
        %v1215 = vadd.f32 %v350, %v1027
        %v1216 = vadd.f32 %v351, %v1030
        %v1217 = vadd.f32 %v352, %v1035
        %v1218 = vadd.f32 %v353, %v1038
        %v1219 = vadd.f32 %v354, %v1043
        %v1220 = vadd.f32 %v355, %v1046
        %v1221 = vadd.f32 %v356, %v1051
        %v1222 = vadd.f32 %v357, %v1054
        %v1223 = vadd.f32 %v358, %v1059
        %v1224 = vadd.f32 %v359, %v1062
        %v1225 = vadd.f32 %v360, %v1067
        %v1226 = vadd.f32 %v361, %v1070
        %v1227 = vadd.f32 %v362, %v1075
        %v1228 = vadd.f32 %v363, %v1078
        %v1229 = vadd.f32 %v364, %v1083
        %v1230 = vadd.f32 %v365, %v1086
        %v1231 = vadd.f32 %v366, %v1091
        %v1232 = vadd.f32 %v367, %v1094
        %v1233 = vadd.f32 %v368, %v1099
        %v1234 = vadd.f32 %v369, %v1102
        %v1235 = vadd.f32 %v370, %v1107
        %v1236 = vadd.f32 %v371, %v1110
        %v1237 = vadd.f32 %v372, %v1115
        %v1238 = vadd.f32 %v373, %v1118
        %v1239 = vadd.f32 %v374, %v1123
        %v1240 = vadd.f32 %v375, %v1126
        %v1241 = vadd.f32 %v376, %v1131
        %v1242 = vadd.f32 %v377, %v1134
        %v1243 = vadd.f32 %v378, %v1139
        %v1244 = vadd.f32 %v379, %v1142
        %v1245 = vadd.f32 %v380, %v1147
        %v1246 = vadd.f32 %v381, %v1150
        %v1247 = vadd.f32 %v382, %v1155
        %v1248 = vadd.f32 %v383, %v1158
        %v1249 = vadd.f32 %v384, %v1163
        %v1250 = vadd.f32 %v385, %v1166
        %v1251 = vadd.f32 %v386, %v1171
        %v1252 = vadd.f32 %v387, %v1174
        %v1253 = vadd.f32 %v388, %v1179
        %v1254 = vadd.f32 %v389, %v1182
        %v1255 = vadd.f32 %v390, %v1187
        %v1256 = vadd.f32 %v391, %v1190
        %1257 = vst [vmem:[#allocation2] sm:$0xff] %v1193
        %1258 = vst [vmem:[#allocation2 + $0x8] sm:$0xff] %v1194
        %1259 = vst [vmem:[#allocation2 + $0x10] sm:$0xff] %v1195
        %1260 = vst [vmem:[#allocation2 + $0x18] sm:$0xff] %v1196
        %1261 = vst [vmem:[#allocation2 + $0x20] sm:$0xff] %v1197
        %1262 = vst [vmem:[#allocation2 + $0x28] sm:$0xff] %v1198
        %1263 = vst [vmem:[#allocation2 + $0x30] sm:$0xff] %v1199
        %1264 = vst [vmem:[#allocation2 + $0x38] sm:$0xff] %v1200
        %1265 = vst [vmem:[#allocation2 + $0x40] sm:$0xff] %v1201
        %1266 = vst [vmem:[#allocation2 + $0x48] sm:$0xff] %v1202
        %1267 = vst [vmem:[#allocation2 + $0x50] sm:$0xff] %v1203
        %1268 = vst [vmem:[#allocation2 + $0x58] sm:$0xff] %v1204
        %1269 = vst [vmem:[#allocation2 + $0x60] sm:$0xff] %v1205
        %1270 = vst [vmem:[#allocation2 + $0x68] sm:$0xff] %v1206
        %1271 = vst [vmem:[#allocation2 + $0x70] sm:$0xff] %v1207
        %1272 = vst [vmem:[#allocation2 + $0x78] sm:$0xff] %v1208
        %1273 = vst [vmem:[#allocation2 + $0x80] sm:$0xff] %v1209
        %1274 = vst [vmem:[#allocation2 + $0x88] sm:$0xff] %v1210
        %1275 = vst [vmem:[#allocation2 + $0x90] sm:$0xff] %v1211
        %1276 = vst [vmem:[#allocation2 + $0x98] sm:$0xff] %v1212
        %1277 = vst [vmem:[#allocation2 + $0xa0] sm:$0xff] %v1213
        %1278 = vst [vmem:[#allocation2 + $0xa8] sm:$0xff] %v1214
        %1279 = vst [vmem:[#allocation2 + $0xb0] sm:$0xff] %v1215
        %1280 = vst [vmem:[#allocation2 + $0xb8] sm:$0xff] %v1216
        %1281 = vst [vmem:[#allocation2 + $0xc0] sm:$0xff] %v1217
        %1282 = vst [vmem:[#allocation2 + $0xc8] sm:$0xff] %v1218
        %1283 = vst [vmem:[#allocation2 + $0xd0] sm:$0xff] %v1219
        %1284 = vst [vmem:[#allocation2 + $0xd8] sm:$0xff] %v1220
        %1285 = vst [vmem:[#allocation2 + $0xe0] sm:$0xff] %v1221
        %1286 = vst [vmem:[#allocation2 + $0xe8] sm:$0xff] %v1222
        %1287 = vst [vmem:[#allocation2 + $0xf0] sm:$0xff] %v1223
        %1288 = vst [vmem:[#allocation2 + $0xf8] sm:$0xff] %v1224
        %1289 = vst [vmem:[#allocation2 + $0x100] sm:$0xff] %v1225
        %1290 = vst [vmem:[#allocation2 + $0x108] sm:$0xff] %v1226
        %1291 = vst [vmem:[#allocation2 + $0x110] sm:$0xff] %v1227
        %1292 = vst [vmem:[#allocation2 + $0x118] sm:$0xff] %v1228
        %1293 = vst [vmem:[#allocation2 + $0x120] sm:$0xff] %v1229
        %1294 = vst [vmem:[#allocation2 + $0x128] sm:$0xff] %v1230
        %1295 = vst [vmem:[#allocation2 + $0x130] sm:$0xff] %v1231
        %1296 = vst [vmem:[#allocation2 + $0x138] sm:$0xff] %v1232
        %1297 = vst [vmem:[#allocation2 + $0x140] sm:$0xff] %v1233
        %1298 = vst [vmem:[#allocation2 + $0x148] sm:$0xff] %v1234
        %1299 = vst [vmem:[#allocation2 + $0x150] sm:$0xff] %v1235
        %1300 = vst [vmem:[#allocation2 + $0x158] sm:$0xff] %v1236
        %1301 = vst [vmem:[#allocation2 + $0x160] sm:$0xff] %v1237
        %1302 = vst [vmem:[#allocation2 + $0x168] sm:$0xff] %v1238
        %1303 = vst [vmem:[#allocation2 + $0x170] sm:$0xff] %v1239
        %1304 = vst [vmem:[#allocation2 + $0x178] sm:$0xff] %v1240
        %1305 = vst [vmem:[#allocation2 + $0x180] sm:$0xff] %v1241
        %1306 = vst [vmem:[#allocation2 + $0x188] sm:$0xff] %v1242
        %1307 = vst [vmem:[#allocation2 + $0x190] sm:$0xff] %v1243
        %1308 = vst [vmem:[#allocation2 + $0x198] sm:$0xff] %v1244
        %1309 = vst [vmem:[#allocation2 + $0x1a0] sm:$0xff] %v1245
        %1310 = vst [vmem:[#allocation2 + $0x1a8] sm:$0xff] %v1246
        %1311 = vst [vmem:[#allocation2 + $0x1b0] sm:$0xff] %v1247
        %1312 = vst [vmem:[#allocation2 + $0x1b8] sm:$0xff] %v1248
        %1313 = vst [vmem:[#allocation2 + $0x1c0] sm:$0xff] %v1249
        %1314 = vst [vmem:[#allocation2 + $0x1c8] sm:$0xff] %v1250
        %1315 = vst [vmem:[#allocation2 + $0x1d0] sm:$0xff] %v1251
        %1316 = vst [vmem:[#allocation2 + $0x1d8] sm:$0xff] %v1252
        %1317 = vst [vmem:[#allocation2 + $0x1e0] sm:$0xff] %v1253
        %1318 = vst [vmem:[#allocation2 + $0x1e8] sm:$0xff] %v1254
        %1319 = vst [vmem:[#allocation2 + $0x1f0] sm:$0xff] %v1255
        %1320 = vst [vmem:[#allocation2 + $0x1f8] sm:$0xff] %v1256
        // Predicated region
        $region45: #{tpu_custom_call.1} parent=31 // pred_check
          %p1321 = pneg %p260
        $region46: #{tpu_custom_call.1} parent=31 // pred_check_branch
          %1323 = sbr.rel (%p1321) target = $region48
        $region47: #{tpu_custom_call.1} parent=31 // pred_region
          %v1324 = vld [vmem:[#allocation2] sm:$0xff]
          %v1325 = vld [vmem:[#allocation2 + $0x8] sm:$0xff]
          %v1326 = vld [vmem:[#allocation2 + $0x10] sm:$0xff]
          %v1327 = vld [vmem:[#allocation2 + $0x18] sm:$0xff]
          %v1328 = vld [vmem:[#allocation2 + $0x20] sm:$0xff]
          %v1329 = vld [vmem:[#allocation2 + $0x28] sm:$0xff]
          %v1330 = vld [vmem:[#allocation2 + $0x30] sm:$0xff]
          %v1331 = vld [vmem:[#allocation2 + $0x38] sm:$0xff]
          %v1332 = vld [vmem:[#allocation2 + $0x40] sm:$0xff]
          %v1333 = vld [vmem:[#allocation2 + $0x48] sm:$0xff]
          %v1334 = vld [vmem:[#allocation2 + $0x50] sm:$0xff]
          %v1335 = vld [vmem:[#allocation2 + $0x58] sm:$0xff]
          %v1336 = vld [vmem:[#allocation2 + $0x60] sm:$0xff]
          %v1337 = vld [vmem:[#allocation2 + $0x68] sm:$0xff]
          %v1338 = vld [vmem:[#allocation2 + $0x70] sm:$0xff]
          %v1339 = vld [vmem:[#allocation2 + $0x78] sm:$0xff]
          %v1340 = vld [vmem:[#allocation2 + $0x80] sm:$0xff]
          %v1341 = vld [vmem:[#allocation2 + $0x88] sm:$0xff]
          %v1342 = vld [vmem:[#allocation2 + $0x90] sm:$0xff]
          %v1343 = vld [vmem:[#allocation2 + $0x98] sm:$0xff]
          %v1344 = vld [vmem:[#allocation2 + $0xa0] sm:$0xff]
          %v1345 = vld [vmem:[#allocation2 + $0xa8] sm:$0xff]
          %v1346 = vld [vmem:[#allocation2 + $0xb0] sm:$0xff]
          %v1347 = vld [vmem:[#allocation2 + $0xb8] sm:$0xff]
          %v1348 = vld [vmem:[#allocation2 + $0xc0] sm:$0xff]
          %v1349 = vld [vmem:[#allocation2 + $0xc8] sm:$0xff]
          %v1350 = vld [vmem:[#allocation2 + $0xd0] sm:$0xff]
          %v1351 = vld [vmem:[#allocation2 + $0xd8] sm:$0xff]
          %v1352 = vld [vmem:[#allocation2 + $0xe0] sm:$0xff]
          %v1353 = vld [vmem:[#allocation2 + $0xe8] sm:$0xff]
          %v1354 = vld [vmem:[#allocation2 + $0xf0] sm:$0xff]
          %v1355 = vld [vmem:[#allocation2 + $0xf8] sm:$0xff]
          %v1356 = vld [vmem:[#allocation2 + $0x100] sm:$0xff]
          %v1357 = vld [vmem:[#allocation2 + $0x108] sm:$0xff]
          %v1358 = vld [vmem:[#allocation2 + $0x110] sm:$0xff]
          %v1359 = vld [vmem:[#allocation2 + $0x118] sm:$0xff]
          %v1360 = vld [vmem:[#allocation2 + $0x120] sm:$0xff]
          %v1361 = vld [vmem:[#allocation2 + $0x128] sm:$0xff]
          %v1362 = vld [vmem:[#allocation2 + $0x130] sm:$0xff]
          %v1363 = vld [vmem:[#allocation2 + $0x138] sm:$0xff]
          %v1364 = vld [vmem:[#allocation2 + $0x140] sm:$0xff]
          %v1365 = vld [vmem:[#allocation2 + $0x148] sm:$0xff]
          %v1366 = vld [vmem:[#allocation2 + $0x150] sm:$0xff]
          %v1367 = vld [vmem:[#allocation2 + $0x158] sm:$0xff]
          %v1368 = vld [vmem:[#allocation2 + $0x160] sm:$0xff]
          %v1369 = vld [vmem:[#allocation2 + $0x168] sm:$0xff]
          %v1370 = vld [vmem:[#allocation2 + $0x170] sm:$0xff]
          %v1371 = vld [vmem:[#allocation2 + $0x178] sm:$0xff]
          %v1372 = vld [vmem:[#allocation2 + $0x180] sm:$0xff]
          %v1373 = vld [vmem:[#allocation2 + $0x188] sm:$0xff]
          %v1374 = vld [vmem:[#allocation2 + $0x190] sm:$0xff]
          %v1375 = vld [vmem:[#allocation2 + $0x198] sm:$0xff]
          %v1376 = vld [vmem:[#allocation2 + $0x1a0] sm:$0xff]
          %v1377 = vld [vmem:[#allocation2 + $0x1a8] sm:$0xff]
          %v1378 = vld [vmem:[#allocation2 + $0x1b0] sm:$0xff]
          %v1379 = vld [vmem:[#allocation2 + $0x1b8] sm:$0xff]
          %v1380 = vld [vmem:[#allocation2 + $0x1c0] sm:$0xff]
          %v1381 = vld [vmem:[#allocation2 + $0x1c8] sm:$0xff]
          %v1382 = vld [vmem:[#allocation2 + $0x1d0] sm:$0xff]
          %v1383 = vld [vmem:[#allocation2 + $0x1d8] sm:$0xff]
          %v1384 = vld [vmem:[#allocation2 + $0x1e0] sm:$0xff]
          %v1385 = vld [vmem:[#allocation2 + $0x1e8] sm:$0xff]
          %v1386 = vld [vmem:[#allocation2 + $0x1f0] sm:$0xff]
          %v1387 = vld [vmem:[#allocation2 + $0x1f8] sm:$0xff]
          %v1388 = vld [vmem:[%s257] sm:$0x1]
          %v1390 = vlaneseq
          %v1391 = vshrl.u32 %v1390, 7
          %v1392 = vsub.s32 0, %v1391
          %v1393 = vrot.slane %v1388, %v1392
          %v1395 = vadd.f32 %v1324, %v1393
          %v1396 = vadd.f32 %v1325, %v1393
          %v1397 = vadd.f32 %v1326, %v1393
          %v1398 = vadd.f32 %v1327, %v1393
          %v1399 = vadd.f32 %v1328, %v1393
          %v1400 = vadd.f32 %v1329, %v1393
          %v1401 = vadd.f32 %v1330, %v1393
          %v1402 = vadd.f32 %v1331, %v1393
          %v1403 = vadd.f32 %v1332, %v1393
          %v1404 = vadd.f32 %v1333, %v1393
          %v1405 = vadd.f32 %v1334, %v1393
          %v1406 = vadd.f32 %v1335, %v1393
          %v1407 = vadd.f32 %v1336, %v1393
          %v1408 = vadd.f32 %v1337, %v1393
          %v1409 = vadd.f32 %v1338, %v1393
          %v1410 = vadd.f32 %v1339, %v1393
          %v1411 = vadd.f32 %v1340, %v1393
          %v1412 = vadd.f32 %v1341, %v1393
          %v1413 = vadd.f32 %v1342, %v1393
          %v1414 = vadd.f32 %v1343, %v1393
          %v1415 = vadd.f32 %v1344, %v1393
          %v1416 = vadd.f32 %v1345, %v1393
          %v1417 = vadd.f32 %v1346, %v1393
          %v1418 = vadd.f32 %v1347, %v1393
          %v1419 = vadd.f32 %v1348, %v1393
          %v1420 = vadd.f32 %v1349, %v1393
          %v1421 = vadd.f32 %v1350, %v1393
          %v1422 = vadd.f32 %v1351, %v1393
          %v1423 = vadd.f32 %v1352, %v1393
          %v1424 = vadd.f32 %v1353, %v1393
          %v1425 = vadd.f32 %v1354, %v1393
          %v1426 = vadd.f32 %v1355, %v1393
          %v1427 = vadd.f32 %v1356, %v1393
          %v1428 = vadd.f32 %v1357, %v1393
          %v1429 = vadd.f32 %v1358, %v1393
          %v1430 = vadd.f32 %v1359, %v1393
          %v1431 = vadd.f32 %v1360, %v1393
          %v1432 = vadd.f32 %v1361, %v1393
          %v1433 = vadd.f32 %v1362, %v1393
          %v1434 = vadd.f32 %v1363, %v1393
          %v1435 = vadd.f32 %v1364, %v1393
          %v1436 = vadd.f32 %v1365, %v1393
          %v1437 = vadd.f32 %v1366, %v1393
          %v1438 = vadd.f32 %v1367, %v1393
          %v1439 = vadd.f32 %v1368, %v1393
          %v1440 = vadd.f32 %v1369, %v1393
          %v1441 = vadd.f32 %v1370, %v1393
          %v1442 = vadd.f32 %v1371, %v1393
          %v1443 = vadd.f32 %v1372, %v1393
          %v1444 = vadd.f32 %v1373, %v1393
          %v1445 = vadd.f32 %v1374, %v1393
          %v1446 = vadd.f32 %v1375, %v1393
          %v1447 = vadd.f32 %v1376, %v1393
          %v1448 = vadd.f32 %v1377, %v1393
          %v1449 = vadd.f32 %v1378, %v1393
          %v1450 = vadd.f32 %v1379, %v1393
          %v1451 = vadd.f32 %v1380, %v1393
          %v1452 = vadd.f32 %v1381, %v1393
          %v1453 = vadd.f32 %v1382, %v1393
          %v1454 = vadd.f32 %v1383, %v1393
          %v1455 = vadd.f32 %v1384, %v1393
          %v1456 = vadd.f32 %v1385, %v1393
          %v1457 = vadd.f32 %v1386, %v1393
          %v1458 = vadd.f32 %v1387, %v1393
          %v1459 = vmax.f32 %v1395, 0.0
          %v1460 = vmax.f32 %v1396, 0.0
          %v1461 = vmax.f32 %v1397, 0.0
          %v1462 = vmax.f32 %v1398, 0.0
          %v1463 = vmax.f32 %v1399, 0.0
          %v1464 = vmax.f32 %v1400, 0.0
          %v1465 = vmax.f32 %v1401, 0.0
          %v1466 = vmax.f32 %v1402, 0.0
          %v1467 = vmax.f32 %v1403, 0.0
          %v1468 = vmax.f32 %v1404, 0.0
          %v1469 = vmax.f32 %v1405, 0.0
          %v1470 = vmax.f32 %v1406, 0.0
          %v1471 = vmax.f32 %v1407, 0.0
          %v1472 = vmax.f32 %v1408, 0.0
          %v1473 = vmax.f32 %v1409, 0.0
          %v1474 = vmax.f32 %v1410, 0.0
          %v1475 = vmax.f32 %v1411, 0.0
          %v1476 = vmax.f32 %v1412, 0.0
          %v1477 = vmax.f32 %v1413, 0.0
          %v1478 = vmax.f32 %v1414, 0.0
          %v1479 = vmax.f32 %v1415, 0.0
          %v1480 = vmax.f32 %v1416, 0.0
          %v1481 = vmax.f32 %v1417, 0.0
          %v1482 = vmax.f32 %v1418, 0.0
          %v1483 = vmax.f32 %v1419, 0.0
          %v1484 = vmax.f32 %v1420, 0.0
          %v1485 = vmax.f32 %v1421, 0.0
          %v1486 = vmax.f32 %v1422, 0.0
          %v1487 = vmax.f32 %v1423, 0.0
          %v1488 = vmax.f32 %v1424, 0.0
          %v1489 = vmax.f32 %v1425, 0.0
          %v1490 = vmax.f32 %v1426, 0.0
          %v1491 = vmax.f32 %v1427, 0.0
          %v1492 = vmax.f32 %v1428, 0.0
          %v1493 = vmax.f32 %v1429, 0.0
          %v1494 = vmax.f32 %v1430, 0.0
          %v1495 = vmax.f32 %v1431, 0.0
          %v1496 = vmax.f32 %v1432, 0.0
          %v1497 = vmax.f32 %v1433, 0.0
          %v1498 = vmax.f32 %v1434, 0.0
          %v1499 = vmax.f32 %v1435, 0.0
          %v1500 = vmax.f32 %v1436, 0.0
          %v1501 = vmax.f32 %v1437, 0.0
          %v1502 = vmax.f32 %v1438, 0.0
          %v1503 = vmax.f32 %v1439, 0.0
          %v1504 = vmax.f32 %v1440, 0.0
          %v1505 = vmax.f32 %v1441, 0.0
          %v1506 = vmax.f32 %v1442, 0.0
          %v1507 = vmax.f32 %v1443, 0.0
          %v1508 = vmax.f32 %v1444, 0.0
          %v1509 = vmax.f32 %v1445, 0.0
          %v1510 = vmax.f32 %v1446, 0.0
          %v1511 = vmax.f32 %v1447, 0.0
          %v1512 = vmax.f32 %v1448, 0.0
          %v1513 = vmax.f32 %v1449, 0.0
          %v1514 = vmax.f32 %v1450, 0.0
          %v1515 = vmax.f32 %v1451, 0.0
          %v1516 = vmax.f32 %v1452, 0.0
          %v1517 = vmax.f32 %v1453, 0.0
          %v1518 = vmax.f32 %v1454, 0.0
          %v1519 = vmax.f32 %v1455, 0.0
          %v1520 = vmax.f32 %v1456, 0.0
          %v1521 = vmax.f32 %v1457, 0.0
          %v1522 = vmax.f32 %v1458, 0.0
          %1523 = vst [vmem:[%s251] sm:$0xff] %v1459
          %1524 = vst [vmem:[%s251 + $0x8] sm:$0xff] %v1460
          %1525 = vst [vmem:[%s251 + $0x10] sm:$0xff] %v1461
          %1526 = vst [vmem:[%s251 + $0x18] sm:$0xff] %v1462
          %1527 = vst [vmem:[%s251 + $0x20] sm:$0xff] %v1463
          %1528 = vst [vmem:[%s251 + $0x28] sm:$0xff] %v1464
          %1529 = vst [vmem:[%s251 + $0x30] sm:$0xff] %v1465
          %1530 = vst [vmem:[%s251 + $0x38] sm:$0xff] %v1466
          %1531 = vst [vmem:[%s251 + $0x40] sm:$0xff] %v1467
          %1532 = vst [vmem:[%s251 + $0x48] sm:$0xff] %v1468
          %1533 = vst [vmem:[%s251 + $0x50] sm:$0xff] %v1469
          %1534 = vst [vmem:[%s251 + $0x58] sm:$0xff] %v1470
          %1535 = vst [vmem:[%s251 + $0x60] sm:$0xff] %v1471
          %1536 = vst [vmem:[%s251 + $0x68] sm:$0xff] %v1472
          %1537 = vst [vmem:[%s251 + $0x70] sm:$0xff] %v1473
          %1538 = vst [vmem:[%s251 + $0x78] sm:$0xff] %v1474
          %1539 = vst [vmem:[%s251 + $0x80] sm:$0xff] %v1475
          %1540 = vst [vmem:[%s251 + $0x88] sm:$0xff] %v1476
          %1541 = vst [vmem:[%s251 + $0x90] sm:$0xff] %v1477
          %1542 = vst [vmem:[%s251 + $0x98] sm:$0xff] %v1478
          %1543 = vst [vmem:[%s251 + $0xa0] sm:$0xff] %v1479
          %1544 = vst [vmem:[%s251 + $0xa8] sm:$0xff] %v1480
          %1545 = vst [vmem:[%s251 + $0xb0] sm:$0xff] %v1481
          %1546 = vst [vmem:[%s251 + $0xb8] sm:$0xff] %v1482
          %1547 = vst [vmem:[%s251 + $0xc0] sm:$0xff] %v1483
          %1548 = vst [vmem:[%s251 + $0xc8] sm:$0xff] %v1484
          %1549 = vst [vmem:[%s251 + $0xd0] sm:$0xff] %v1485
          %1550 = vst [vmem:[%s251 + $0xd8] sm:$0xff] %v1486
          %1551 = vst [vmem:[%s251 + $0xe0] sm:$0xff] %v1487
          %1552 = vst [vmem:[%s251 + $0xe8] sm:$0xff] %v1488
          %1553 = vst [vmem:[%s251 + $0xf0] sm:$0xff] %v1489
          %1554 = vst [vmem:[%s251 + $0xf8] sm:$0xff] %v1490
          %1555 = vst [vmem:[%s251 + $0x100] sm:$0xff] %v1491
          %1556 = vst [vmem:[%s251 + $0x108] sm:$0xff] %v1492
          %1557 = vst [vmem:[%s251 + $0x110] sm:$0xff] %v1493
          %1558 = vst [vmem:[%s251 + $0x118] sm:$0xff] %v1494
          %1559 = vst [vmem:[%s251 + $0x120] sm:$0xff] %v1495
          %1560 = vst [vmem:[%s251 + $0x128] sm:$0xff] %v1496
          %1561 = vst [vmem:[%s251 + $0x130] sm:$0xff] %v1497
          %1562 = vst [vmem:[%s251 + $0x138] sm:$0xff] %v1498
          %1563 = vst [vmem:[%s251 + $0x140] sm:$0xff] %v1499
          %1564 = vst [vmem:[%s251 + $0x148] sm:$0xff] %v1500
          %1565 = vst [vmem:[%s251 + $0x150] sm:$0xff] %v1501
          %1566 = vst [vmem:[%s251 + $0x158] sm:$0xff] %v1502
          %1567 = vst [vmem:[%s251 + $0x160] sm:$0xff] %v1503
          %1568 = vst [vmem:[%s251 + $0x168] sm:$0xff] %v1504
          %1569 = vst [vmem:[%s251 + $0x170] sm:$0xff] %v1505
          %1570 = vst [vmem:[%s251 + $0x178] sm:$0xff] %v1506
          %1571 = vst [vmem:[%s251 + $0x180] sm:$0xff] %v1507
          %1572 = vst [vmem:[%s251 + $0x188] sm:$0xff] %v1508
          %1573 = vst [vmem:[%s251 + $0x190] sm:$0xff] %v1509
          %1574 = vst [vmem:[%s251 + $0x198] sm:$0xff] %v1510
          %1575 = vst [vmem:[%s251 + $0x1a0] sm:$0xff] %v1511
          %1576 = vst [vmem:[%s251 + $0x1a8] sm:$0xff] %v1512
          %1577 = vst [vmem:[%s251 + $0x1b0] sm:$0xff] %v1513
          %1578 = vst [vmem:[%s251 + $0x1b8] sm:$0xff] %v1514
          %1579 = vst [vmem:[%s251 + $0x1c0] sm:$0xff] %v1515
          %1580 = vst [vmem:[%s251 + $0x1c8] sm:$0xff] %v1516
          %1581 = vst [vmem:[%s251 + $0x1d0] sm:$0xff] %v1517
          %1582 = vst [vmem:[%s251 + $0x1d8] sm:$0xff] %v1518
          %1583 = vst [vmem:[%s251 + $0x1e0] sm:$0xff] %v1519
          %1584 = vst [vmem:[%s251 + $0x1e8] sm:$0xff] %v1520
          %1585 = vst [vmem:[%s251 + $0x1f0] sm:$0xff] %v1521
          %1586 = vst [vmem:[%s251 + $0x1f8] sm:$0xff] %v1522
        $region48: #{tpu_custom_call.1} parent=31 // pred_fallthru
          _
        %s1587 = sand.u32 %s132, 1
        %s1588 = scalar_lea.sflag [#allocation5], %s1587
        %s1589 = sand.u32 %s132, 1
        %s1590 = smul.addr %s1589, 512
        %s1591 = scalar_lea.vmem [#allocation8], %s1590
        // Predicated region
        $region49: #{tpu_custom_call.1} parent=31 // pred_check
          %p1592 = pneg %p142
        $region50: #{tpu_custom_call.1} parent=31 // pred_check_branch
          %1594 = sbr.rel (%p1592) target = $region52
        $region51: #{tpu_custom_call.1} parent=31 // pred_region
          %s1595 = smul.u32 64, %s26
          %s1597 = ssub.s32 8192, 8192
          %1598 = vsyncadd %s1588, %s1597
          %s1599 = sadd.s32 %s27, %s1595
          %s1600 = smul.addr %s1599, 128
          %s1601 = scalar_lea.hbm %s3, %s1600
          %s1602 = sshll.u32 %s1591, 4
          %s1603 = int_to_ptr.vmem [resolvable:$true] %s1602
          %1608 = dma.vmem_to_hbm [thread:$0]  %s1603, 8192, %s1601, %s1588, 128, 128, 8
        $region52: #{tpu_custom_call.1} parent=31 // pred_fallthru
          _
      $region32: #{tpu_custom_call.1} parent=5 // pred_fallthru
        _
      %p1609 = scmp.le.s32.totalorder 2, %s16
      // Predicated region
      $region53: #{tpu_custom_call.1} parent=5 // pred_check
        %p1610 = pneg %p1609
      $region54: #{tpu_custom_call.1} parent=5 // pred_check_branch
        %1612 = sbr.rel (%p1610) target = $region56
      $region55: #{tpu_custom_call.1} parent=5 // pred_region
        %s1613 = ssub.s32 %s16, 2
        // Predicated region
        $region57: #{tpu_custom_call.1} parent=55 // pred_check
          %p1614 = pneg %p148
        $region58: #{tpu_custom_call.1} parent=55 // pred_check_branch
          %1616 = sbr.rel (%p1614) target = $region60
        $region59: #{tpu_custom_call.1} parent=55 // pred_region
          %s1617 = sand.u32 %s133, 1
          %s1618 = scalar_lea.sflag [#allocation5], %s1617
          %s1619 = sand.u32 %s133, 1
          %s1620 = smul.addr %s1619, 512
          %s1621 = scalar_lea.vmem [#allocation8], %s1620
          %1622 = dma.done %s1618, 8192
        $region60: #{tpu_custom_call.1} parent=55 // pred_fallthru
          _
      $region56: #{tpu_custom_call.1} parent=5 // pred_fallthru
        _
    $region6: #{tpu_custom_call.1} parent=1 // loop_footer
      %s20 = sadd.s32 1, %s16
    $region7: #{tpu_custom_call.1} parent=1 // loop_footer_branch
      %15 = sbr.rel target = $region3
    $region8: #{tpu_custom_call.1} parent=1 // loop_exit
      _
    %1623 = vsyncpa [#allocation4], 1
    %s1624 = scalar_lea.sflag [#allocation4], 1
    %1625 = vsyncpa %s1624, 1
    %1626 = vsyncpa [#allocation7], 1
    %1627 = vsyncpa [#allocation5], 1
    %s1628 = scalar_lea.sflag [#allocation5], 1
    %1629 = vsyncpa %s1628, 1

</llo_original>
